<compile_context>
chip_gen: v7x
topology: tpu7x:2x2x1
jax: 0.10.0
libtpu: 0.0.40
codegen_flags: <defaults>
</compile_context>

<pallas_src>
import functools
import math

import jax
import jax.numpy as jnp
from jax.experimental import pallas as pl
from jax.experimental.pallas import tpu as pltpu


def _round_up(n, m):
    return ((n + m - 1) // m) * m


_MAX_TK = 2048     # K tile used only when K is huge (never hit for this model)
_MAX_TM = 512      # M tile cap


# --------------------------------------------------------------------------- #
# Pallas kernel: out = [relu](x @ w + b); f32 accumulation in VMEM scratch,
# result cast to o_ref.dtype (bf16 for intermediate layers, f32 for logits).
# --------------------------------------------------------------------------- #

def _matmul_bias_act_kernel(x_ref, w_ref, b_ref, o_ref, acc_ref, *, apply_relu):
    k = pl.program_id(1)

    @pl.when(k == 0)
    def _():
        acc_ref[...] = jnp.zeros_like(acc_ref)

    acc_ref[...] += jnp.dot(x_ref[...], w_ref[...],
                            preferred_element_type=jnp.float32)

    @pl.when(k == pl.num_programs(1) - 1)
    def _():
        out = acc_ref[...] + b_ref[...]
        if apply_relu:
            out = jnp.maximum(out, 0.0)
        o_ref[...] = out.astype(o_ref.dtype)


def make_linear_plan(w_mat, b):
    """Reshape/transpose/pad a weight matrix ONCE at init.

    w_mat: (K, N) f32 in the im2col K ordering (cin-major, tap-minor for conv
    layers; channels-last (d, h, w, c) ordering for the FC).  b: (N,) f32.
    """
    K, N = w_mat.shape
    Np = _round_up(max(N, 1), 128)
    if K <= _MAX_TK:
        tk, Kp = K, K                      # single K step -> no K padding at all
    else:
        tk = _MAX_TK
        Kp = _round_up(K, tk)
    wp = jnp.zeros((Kp, Np), jnp.bfloat16).at[:K, :N].set(w_mat.astype(jnp.bfloat16))
    bp = jnp.zeros((1, Np), jnp.float32).at[0, :N].set(b.astype(jnp.float32))
    return dict(K=K, N=N, Kp=Kp, Np=Np, tk=tk, wp=wp, bp=bp)


def _choose_tm(M):
    """M tile: one full-extent block for tiny M (no padding); otherwise a
    16-aligned tile giving >= 2 grid steps on the parallel M axis (v7x dual
    TensorCore), capped at _MAX_TM."""
    if M <= 32:
        return M, M
    tm = min(_MAX_TM, _round_up(pl.cdiv(M, 2), 16))
    return tm, _round_up(M, tm)


def linear_pallas(x, plan, *, apply_relu, out_dtype):
    """y = [relu](x @ W + b) with pre-padded bf16 weights.  x: (M, K) -> (M, N)."""
    M, K = x.shape
    assert K == plan["K"], (K, plan["K"])
    Kp, Np, tk, N = plan["Kp"], plan["Np"], plan["tk"], plan["N"]

    tm, Mp = _choose_tm(M)

    xb = x.astype(jnp.bfloat16)            # no-op: activations are kept bf16
    if (Mp, Kp) != (M, K):
        xb = jnp.pad(xb, ((0, Mp - M), (0, Kp - K)))

    grid = (Mp // tm, Kp // tk)
    out_bytes = jnp.dtype(out_dtype).itemsize
    need = (2 * tm * tk * 2 + 2 * tk * Np * 2 + 2 * tm * Np * out_bytes
            + tm * Np * 4 + 2 * Np * 4)
    # >= 32 MiB (v5e default is only 16 MiB), capped at 48 MiB (v7x has 64 MiB
    # physical VMEM; leave headroom for compiler-internal scratch).
    vmem_limit = int(min(48 * 1024 * 1024, max(32 * 1024 * 1024, 2 * need)))

    cost = pl.CostEstimate(
        flops=2 * Mp * Kp * Np,
        transcendentals=0,
        bytes_accessed=int(Mp * Kp * 2 + Kp * Np * 2 + Mp * Np * out_bytes + Np * 4),
    )

    out = pl.pallas_call(
        functools.partial(_matmul_bias_act_kernel, apply_relu=apply_relu),
        out_shape=jax.ShapeDtypeStruct((Mp, Np), out_dtype),
        grid_spec=pltpu.PrefetchScalarGridSpec(
            num_scalar_prefetch=0,
            grid=grid,
            in_specs=[
                pl.BlockSpec((tm, tk), lambda m, k: (m, k)),
                pl.BlockSpec((tk, Np), lambda m, k: (k, 0)),
                pl.BlockSpec((1, Np), lambda m, k: (0, 0)),
            ],
            out_specs=pl.BlockSpec((tm, Np), lambda m, k: (m, 0)),
            scratch_shapes=[pltpu.VMEM((tm, Np), jnp.float32)],
        ),
        compiler_params=pltpu.CompilerParams(
            dimension_semantics=("parallel", "arbitrary"),
            vmem_limit_bytes=vmem_limit),
        cost_estimate=cost,
    )(xb, plan["wp"], plan["bp"])
    return out[:M, :N]


# --------------------------------------------------------------------------- #
# Channels-last im2col (data movement only; compute is in the Pallas kernel).
# --------------------------------------------------------------------------- #

def _im2col_3d_cl(x, kernel, stride, padding, dilation):
    """x: (B, D, H, W, Cin) -> ((B*Do*Ho*Wo, Cin*kD*kH*kW), (Do, Ho, Wo)).

    Taps are stacked on the LAST axis so the reshape to (M, K) is free and K
    is (cin-major, tap-minor), matching make_linear_plan's weight ordering.
    """
    kD, kH, kW = kernel
    sD, sH, sW = stride
    pD, pH, pW = padding
    dD, dH, dW = dilation
    B, D, H, W, Cin = x.shape
    xp = jnp.pad(x, ((0, 0), (pD, pD), (pH, pH), (pW, pW), (0, 0)))
    Dp, Hp, Wp = D + 2 * pD, H + 2 * pH, W + 2 * pW
    Do = (Dp - dD * (kD - 1) - 1) // sD + 1
    Ho = (Hp - dH * (kH - 1) - 1) // sH + 1
    Wo = (Wp - dW * (kW - 1) - 1) // sW + 1

    taps = []
    for kd in range(kD):
        for kh in range(kH):
            for kw in range(kW):
                taps.append(xp[:,
                               kd * dD: kd * dD + (Do - 1) * sD + 1: sD,
                               kh * dH: kh * dH + (Ho - 1) * sH + 1: sH,
                               kw * dW: kw * dW + (Wo - 1) * sW + 1: sW,
                               :])
    patches = jnp.stack(taps, axis=-1)               # (B, Do, Ho, Wo, Cin, T)
    return patches.reshape(B * Do * Ho * Wo, Cin * kD * kH * kW), (Do, Ho, Wo)


def conv3d_pallas(x_cl, plan, layer, *, apply_relu):
    """x_cl: (B, D, H, W, Cin) bf16 -> (B, Do, Ho, Wo, Cout) bf16."""
    B = x_cl.shape[0]
    cols, (Do, Ho, Wo) = _im2col_3d_cl(x_cl, layer["kernel"], layer["stride"],
                                       layer["padding"], layer["dilation"])
    y = linear_pallas(cols, plan, apply_relu=apply_relu, out_dtype=jnp.bfloat16)
    return y.reshape(B, Do, Ho, Wo, plan["N"])


# --------------------------------------------------------------------------- #
# Model definition (matches HamidaEtAl exactly).
# --------------------------------------------------------------------------- #

def _out_size(n, k, s, p, d):
    return (n + 2 * p - d * (k - 1) - 1) // s + 1


def init_model(key, input_channels, n_classes, patch_size=5, dilation=1):
    p1 = 1 if patch_size == 3 else 0
    dil3 = (dilation, 1, 1)
    # name, Cin, Cout, kernel, stride, padding, relu-after
    layer_defs = [
        ("conv1", 1, 20, (3, 3, 3), (1, 1, 1), (p1, p1, p1), True),
        ("pool1", 20, 20, (3, 1, 1), (2, 1, 1), (1, 0, 0), False),
        ("conv2", 20, 35, (3, 3, 3), (1, 1, 1), (1, 0, 0), True),
        ("pool2", 35, 35, (3, 1, 1), (2, 1, 1), (1, 0, 0), False),
        ("conv3", 35, 35, (3, 1, 1), (1, 1, 1), (1, 0, 0), True),
        ("conv4", 35, 35, (2, 1, 1), (2, 1, 1), (1, 0, 0), True),
    ]
    params, plans, layers = {}, {}, []
    keys = jax.random.split(key, len(layer_defs) + 1)
    D, H, W = input_channels, patch_size, patch_size
    cout = 1
    for i, (name, cin, cout, ksz, stride, pad, relu) in enumerate(layer_defs):
        fan_in = cin * ksz[0] * ksz[1] * ksz[2]
        w = jax.random.normal(keys[i], (cout, cin) + ksz, jnp.float32) \
            * math.sqrt(2.0 / fan_in)                    # kaiming_normal_
        b = jnp.zeros((cout,), jnp.float32)              # init.zeros_
        params[name + "_w"], params[name + "_b"] = w, b
        # (Cout, Cin, kD, kH, kW) -> (Cin*T, Cout): cin-major, tap-minor K
        # ordering, matching the taps-stacked-last channels-last im2col.
        plans[name] = make_linear_plan(w.reshape(cout, -1).T, b)
        layers.append(dict(name=name, kernel=ksz, stride=stride, padding=pad,
                           dilation=dil3, relu=relu))
        D = _out_size(D, ksz[0], stride[0], pad[0], dil3[0])
        H = _out_size(H, ksz[1], stride[1], pad[1], dil3[1])
        W = _out_size(W, ksz[2], stride[2], pad[2], dil3[2])
    features_size = cout * D * H * W
    fc_w = jax.random.normal(keys[-1], (n_classes, features_size), jnp.float32) \
        * math.sqrt(2.0 / features_size)
    fc_b = jnp.zeros((n_classes,), jnp.float32)
    params["fc_w"], params["fc_b"] = fc_w, fc_b
    # Permute the FC weight rows once so the kernel path can use the
    # channels-last (d, h, w, c) feature flatten (no transpose per forward).
    fc_w_cl = fc_w.reshape(n_classes, cout, D, H, W) \
                  .transpose(0, 2, 3, 4, 1).reshape(n_classes, features_size)
    plans["fc"] = make_linear_plan(fc_w_cl.T, fc_b)
    cfg = dict(layers=layers, features_size=features_size, n_classes=n_classes)
    return params, plans, cfg


def forward(plans, cfg, x):
    """x: (B, 1, C, P, P) f32 (PyTorch NCDHW layout) -> logits (B, n_classes) f32."""
    # Single layout change + cast: channels-last bf16 activations throughout.
    y = jnp.transpose(x, (0, 2, 3, 4, 1)).astype(jnp.bfloat16)   # (B, D, H, W, 1)
    for layer in cfg["layers"]:
        y = conv3d_pallas(y, plans[layer["name"]], layer,
                          apply_relu=layer["relu"])
    B = y.shape[0]
    feat = y.reshape(B, cfg["features_size"])    # (d, h, w, c) flatten; fc plan matches
    return linear_pallas(feat, plans["fc"], apply_relu=False, out_dtype=jnp.float32)


# --------------------------------------------------------------------------- #
# Pure-JAX reference (PyTorch layer semantics, NCDHW, channels-first flatten).
# compute_dtype=bfloat16 mirrors the kernel numerics (bf16 MXU inputs, f32
# accumulation); compute_dtype=float32 is the full-precision reference.
# --------------------------------------------------------------------------- #

def reference_forward(params, cfg, x, compute_dtype):
    hi = jax.lax.Precision.HIGHEST

    def conv3d(x, w, b, stride, padding, dilation, relu):
        y = jax.lax.conv_general_dilated(
            x.astype(compute_dtype), w.astype(compute_dtype),
            window_strides=stride,
            padding=[(p, p) for p in padding],
            rhs_dilation=dilation,
            dimension_numbers=("NCDHW", "OIDHW", "NCDHW"),
            precision=hi,
            preferred_element_type=jnp.float32)
        y = y + b[None, :, None, None, None]
        return jnp.maximum(y, 0.0) if relu else y

    y = x
    for layer in cfg["layers"]:
        n = layer["name"]
        y = conv3d(y, params[n + "_w"], params[n + "_b"], layer["stride"],
                   layer["padding"], layer["dilation"], layer["relu"])
    B = y.shape[0]
    feat = y.reshape(B, -1)
    logits = jnp.dot(feat.astype(compute_dtype),
                     params["fc_w"].T.astype(compute_dtype),
                     precision=hi, preferred_element_type=jnp.float32)
    return logits + params["fc_b"]


# --------------------------------------------------------------------------- #

if __name__ == "__main__":
    key = jax.random.PRNGKey(0)
    k_param, k_x = jax.random.split(key)

    # small shapes: B=2, 16 spectral channels, 5x5 patch, 10 classes
    input_channels, n_classes, patch_size = 16, 10, 5
    params, plans, cfg = init_model(k_param, input_channels, n_classes,
                                    patch_size=patch_size, dilation=1)

    x = jax.random.normal(
        k_x, (2, 1, input_channels, patch_size, patch_size), jnp.float32)

    fwd = jax.jit(lambda xx: forward(plans, cfg, xx))
    out = jax.block_until_ready(fwd(x))
    assert out.shape == (2, n_classes), out.shape

    # Check against a reference with matching (bf16 inputs / f32 acc) numerics.
    ref_bf16 = jax.block_until_ready(
        reference_forward(params, cfg, x, jnp.bfloat16))
    err = float(jnp.max(jnp.abs(out - ref_bf16)))
    assert jnp.allclose(out, ref_bf16, rtol=2e-2, atol=2e-2), err

    # Loose sanity check against the full-f32 reference (bf16 MXU tolerance).
    ref_f32 = jax.block_until_ready(
        reference_forward(params, cfg, x, jnp.float32))
    rel = float(jnp.max(jnp.abs(out - ref_f32)) /
                (jnp.max(jnp.abs(ref_f32)) + 1e-6))
    assert rel < 5e-2, rel

    print("KERNEL_OK")
</pallas_src>

<mosaic_0001>
module attributes {stable_mosaic.version = 11 : i64} {
  func.func @_matmul_bias_act_kernel(%arg0: i32, %arg1: i32, %arg2: memref<128x27xbf16, #tpu.memory_space<vmem>>, %arg3: memref<27x128xbf16, #tpu.memory_space<vmem>>, %arg4: memref<1x128xf32, #tpu.memory_space<vmem>>, %arg5: memref<128x128xbf16, #tpu.memory_space<vmem>>, %arg6: memref<128x128xf32, #tpu.memory_space<vmem>>) attributes {dimension_semantics = [#tpu.dimension_semantics<parallel>, #tpu.dimension_semantics<arbitrary>], iteration_bounds = array<i64: 2, 1>, scalar_prefetch = 0 : i64, scratch_operands = 1 : i64, tpu.core_type = #tpu.core_type<tc>, window_params = [{transform_indices = @transform_0, window_bounds = array<i64: 128, 27>}, {transform_indices = @transform_1, window_bounds = array<i64: 27, 128>}, {pipeline_mode = #tpu.pipeline_mode<synchronous>, transform_indices = @transform_2, window_bounds = array<i64: 1, 128>}, {transform_indices = @transform_3, window_bounds = array<i64: 128, 128>}]} {
    %c0_i32 = arith.constant 0 : i32
    %0 = arith.cmpi eq, %arg1, %c0_i32 : i32
    %1 = arith.extui %0 : i1 to i32
    %c0_i32_0 = arith.constant 0 : i32
    %2 = arith.cmpi ne, %1, %c0_i32_0 : i32
    scf.if %2 {
      %cst_10 = arith.constant 0.000000e+00 : f32
      %12 = vector.broadcast %cst_10 : f32 to vector<128x128xf32>
      %c0_11 = arith.constant 0 : index
      %c0_12 = arith.constant 0 : index
      %13 = vector.load %arg6[%c0_11, %c0_12] : memref<128x128xf32, #tpu.memory_space<vmem>>, vector<128x128xf32>
      tpu.vector_store %arg6[%c0_11, %c0_12], %12 {strides = array<i32>} : memref<128x128xf32, #tpu.memory_space<vmem>>, vector<128x128xf32>,
    } else {
    }
    %c0 = arith.constant 0 : index
    %c0_1 = arith.constant 0 : index
    %3 = vector.load %arg6[%c0, %c0_1] : memref<128x128xf32, #tpu.memory_space<vmem>>, vector<128x128xf32>
    %c0_2 = arith.constant 0 : index
    %c0_3 = arith.constant 0 : index
    %4 = vector.load %arg2[%c0_2, %c0_3] : memref<128x27xbf16, #tpu.memory_space<vmem>>, vector<128x27xbf16>
    %c0_4 = arith.constant 0 : index
    %c0_5 = arith.constant 0 : index
    %5 = vector.load %arg3[%c0_4, %c0_5] : memref<27x128xbf16, #tpu.memory_space<vmem>>, vector<27x128xbf16>
    %cst = arith.constant dense<0.000000e+00> : vector<128x128xf32>
    %6 = tpu.matmul %4, %5, %cst {dimension_numbers = #tpu.dot_dimension_numbers<[1], [0], [0], [1], [0, 0, 1, 1], [], []>} : vector<128x27xbf16>, vector<27x128xbf16>, vector<128x128xf32> -> vector<128x128xf32>
    %7 = arith.addf %3, %6 : vector<128x128xf32>
    %c0_6 = arith.constant 0 : index
    %c0_7 = arith.constant 0 : index
    %8 = vector.load %arg6[%c0_6, %c0_7] : memref<128x128xf32, #tpu.memory_space<vmem>>, vector<128x128xf32>
    tpu.vector_store %arg6[%c0_6, %c0_7], %7 {strides = array<i32>} : memref<128x128xf32, #tpu.memory_space<vmem>>, vector<128x128xf32>,
    %c0_i32_8 = arith.constant 0 : i32
    %9 = arith.cmpi eq, %arg1, %c0_i32_8 : i32
    %10 = arith.extui %9 : i1 to i32
    %c0_i32_9 = arith.constant 0 : i32
    %11 = arith.cmpi ne, %10, %c0_i32_9 : i32
    scf.if %11 {
      %c0_10 = arith.constant 0 : index
      %c0_11 = arith.constant 0 : index
      %12 = vector.load %arg6[%c0_10, %c0_11] : memref<128x128xf32, #tpu.memory_space<vmem>>, vector<128x128xf32>
      %c0_12 = arith.constant 0 : index
      %c0_13 = arith.constant 0 : index
      %13 = vector.load %arg4[%c0_12, %c0_13] : memref<1x128xf32, #tpu.memory_space<vmem>>, vector<1x128xf32>
      %14 = vector.broadcast %13 : vector<1x128xf32> to vector<128x128xf32>
      %15 = arith.addf %12, %14 : vector<128x128xf32>
      %cst_14 = arith.constant 0.000000e+00 : f32
      %16 = vector.broadcast %cst_14 : f32 to vector<128x128xf32>
      %17 = arith.maximumf %15, %16 : vector<128x128xf32>
      %18 = arith.truncf %17 : vector<128x128xf32> to vector<128x128xbf16>
      %c0_15 = arith.constant 0 : index
      %c0_16 = arith.constant 0 : index
      %19 = vector.load %arg5[%c0_15, %c0_16] : memref<128x128xbf16, #tpu.memory_space<vmem>>, vector<128x128xbf16>
      tpu.vector_store %arg5[%c0_15, %c0_16], %18 {strides = array<i32>} : memref<128x128xbf16, #tpu.memory_space<vmem>>, vector<128x128xbf16>,
    } else {
    }
    return
  }
  func.func @transform_0(%arg0: i32, %arg1: i32) -> (i32, i32) {
    %c0_i32 = arith.constant 0 : i32
    return %arg0, %arg1 : i32, i32
  }
  func.func @transform_1(%arg0: i32, %arg1: i32) -> (i32, i32) {
    %c0_i32 = arith.constant 0 : i32
    %c0_i32_0 = arith.constant 0 : i32
    return %arg1, %c0_i32 : i32, i32
  }
  func.func @transform_2(%arg0: i32, %arg1: i32) -> (i32, i32) {
    %c0_i32 = arith.constant 0 : i32
    %c0_i32_0 = arith.constant 0 : i32
    %c0_i32_1 = arith.constant 0 : i32
    return %c0_i32, %c0_i32_0 : i32, i32
  }
  func.func @transform_3(%arg0: i32, %arg1: i32) -> (i32, i32) {
    %c0_i32 = arith.constant 0 : i32
    %c0_i32_0 = arith.constant 0 : i32
    return %arg0, %c0_i32 : i32, i32
  }
}

module attributes {stable_mosaic.version = 11 : i64} {
  func.func @_matmul_bias_act_kernel(%arg0: i32, %arg1: i32, %arg2: memref<64x60xbf16, #tpu.memory_space<vmem>>, %arg3: memref<60x128xbf16, #tpu.memory_space<vmem>>, %arg4: memref<1x128xf32, #tpu.memory_space<vmem>>, %arg5: memref<64x128xbf16, #tpu.memory_space<vmem>>, %arg6: memref<64x128xf32, #tpu.memory_space<vmem>>) attributes {dimension_semantics = [#tpu.dimension_semantics<parallel>, #tpu.dimension_semantics<arbitrary>], iteration_bounds = array<i64: 2, 1>, scalar_prefetch = 0 : i64, scratch_operands = 1 : i64, tpu.core_type = #tpu.core_type<tc>, window_params = [{transform_indices = @transform_0, window_bounds = array<i64: 64, 60>}, {transform_indices = @transform_1, window_bounds = array<i64: 60, 128>}, {pipeline_mode = #tpu.pipeline_mode<synchronous>, transform_indices = @transform_2, window_bounds = array<i64: 1, 128>}, {transform_indices = @transform_3, window_bounds = array<i64: 64, 128>}]} {
    %c0_i32 = arith.constant 0 : i32
    %0 = arith.cmpi eq, %arg1, %c0_i32 : i32
    %1 = arith.extui %0 : i1 to i32
    %c0_i32_0 = arith.constant 0 : i32
    %2 = arith.cmpi ne, %1, %c0_i32_0 : i32
    scf.if %2 {
      %cst_10 = arith.constant 0.000000e+00 : f32
      %12 = vector.broadcast %cst_10 : f32 to vector<64x128xf32>
      %c0_11 = arith.constant 0 : index
      %c0_12 = arith.constant 0 : index
      %13 = vector.load %arg6[%c0_11, %c0_12] : memref<64x128xf32, #tpu.memory_space<vmem>>, vector<64x128xf32>
      tpu.vector_store %arg6[%c0_11, %c0_12], %12 {strides = array<i32>} : memref<64x128xf32, #tpu.memory_space<vmem>>, vector<64x128xf32>,
    } else {
    }
    %c0 = arith.constant 0 : index
    %c0_1 = arith.constant 0 : index
    %3 = vector.load %arg6[%c0, %c0_1] : memref<64x128xf32, #tpu.memory_space<vmem>>, vector<64x128xf32>
    %c0_2 = arith.constant 0 : index
    %c0_3 = arith.constant 0 : index
    %4 = vector.load %arg2[%c0_2, %c0_3] : memref<64x60xbf16, #tpu.memory_space<vmem>>, vector<64x60xbf16>
    %c0_4 = arith.constant 0 : index
    %c0_5 = arith.constant 0 : index
    %5 = vector.load %arg3[%c0_4, %c0_5] : memref<60x128xbf16, #tpu.memory_space<vmem>>, vector<60x128xbf16>
    %cst = arith.constant dense<0.000000e+00> : vector<64x128xf32>
    %6 = tpu.matmul %4, %5, %cst {dimension_numbers = #tpu.dot_dimension_numbers<[1], [0], [0], [1], [0, 0, 1, 1], [], []>} : vector<64x60xbf16>, vector<60x128xbf16>, vector<64x128xf32> -> vector<64x128xf32>
    %7 = arith.addf %3, %6 : vector<64x128xf32>
    %c0_6 = arith.constant 0 : index
    %c0_7 = arith.constant 0 : index
    %8 = vector.load %arg6[%c0_6, %c0_7] : memref<64x128xf32, #tpu.memory_space<vmem>>, vector<64x128xf32>
    tpu.vector_store %arg6[%c0_6, %c0_7], %7 {strides = array<i32>} : memref<64x128xf32, #tpu.memory_space<vmem>>, vector<64x128xf32>,
    %c0_i32_8 = arith.constant 0 : i32
    %9 = arith.cmpi eq, %arg1, %c0_i32_8 : i32
    %10 = arith.extui %9 : i1 to i32
    %c0_i32_9 = arith.constant 0 : i32
    %11 = arith.cmpi ne, %10, %c0_i32_9 : i32
    scf.if %11 {
      %c0_10 = arith.constant 0 : index
      %c0_11 = arith.constant 0 : index
      %12 = vector.load %arg6[%c0_10, %c0_11] : memref<64x128xf32, #tpu.memory_space<vmem>>, vector<64x128xf32>
      %c0_12 = arith.constant 0 : index
      %c0_13 = arith.constant 0 : index
      %13 = vector.load %arg4[%c0_12, %c0_13] : memref<1x128xf32, #tpu.memory_space<vmem>>, vector<1x128xf32>
      %14 = vector.broadcast %13 : vector<1x128xf32> to vector<64x128xf32>
      %15 = arith.addf %12, %14 : vector<64x128xf32>
      %16 = arith.truncf %15 : vector<64x128xf32> to vector<64x128xbf16>
      %c0_14 = arith.constant 0 : index
      %c0_15 = arith.constant 0 : index
      %17 = vector.load %arg5[%c0_14, %c0_15] : memref<64x128xbf16, #tpu.memory_space<vmem>>, vector<64x128xbf16>
      tpu.vector_store %arg5[%c0_14, %c0_15], %16 {strides = array<i32>} : memref<64x128xbf16, #tpu.memory_space<vmem>>, vector<64x128xbf16>,
    } else {
    }
    return
  }
  func.func @transform_0(%arg0: i32, %arg1: i32) -> (i32, i32) {
    %c0_i32 = arith.constant 0 : i32
    return %arg0, %arg1 : i32, i32
  }
  func.func @transform_1(%arg0: i32, %arg1: i32) -> (i32, i32) {
    %c0_i32 = arith.constant 0 : i32
    %c0_i32_0 = arith.constant 0 : i32
    return %arg1, %c0_i32 : i32, i32
  }
  func.func @transform_2(%arg0: i32, %arg1: i32) -> (i32, i32) {
    %c0_i32 = arith.constant 0 : i32
    %c0_i32_0 = arith.constant 0 : i32
    %c0_i32_1 = arith.constant 0 : i32
    return %c0_i32, %c0_i32_0 : i32, i32
  }
  func.func @transform_3(%arg0: i32, %arg1: i32) -> (i32, i32) {
    %c0_i32 = arith.constant 0 : i32
    %c0_i32_0 = arith.constant 0 : i32
    return %arg0, %c0_i32 : i32, i32
  }
}

module attributes {stable_mosaic.version = 11 : i64} {
  func.func @_matmul_bias_act_kernel(%arg0: i32, %arg1: i32, %arg2: memref<14x540xbf16, #tpu.memory_space<vmem>>, %arg3: memref<540x128xbf16, #tpu.memory_space<vmem>>, %arg4: memref<1x128xf32, #tpu.memory_space<vmem>>, %arg5: memref<14x128xbf16, #tpu.memory_space<vmem>>, %arg6: memref<14x128xf32, #tpu.memory_space<vmem>>) attributes {dimension_semantics = [#tpu.dimension_semantics<parallel>, #tpu.dimension_semantics<arbitrary>], iteration_bounds = array<i64: 1, 1>, scalar_prefetch = 0 : i64, scratch_operands = 1 : i64, tpu.core_type = #tpu.core_type<tc>, window_params = [{transform_indices = @transform_0, window_bounds = array<i64: 14, 540>}, {transform_indices = @transform_1, window_bounds = array<i64: 540, 128>}, {pipeline_mode = #tpu.pipeline_mode<synchronous>, transform_indices = @transform_2, window_bounds = array<i64: 1, 128>}, {transform_indices = @transform_3, window_bounds = array<i64: 14, 128>}]} {
    %c0_i32 = arith.constant 0 : i32
    %0 = arith.cmpi eq, %arg1, %c0_i32 : i32
    %1 = arith.extui %0 : i1 to i32
    %c0_i32_0 = arith.constant 0 : i32
    %2 = arith.cmpi ne, %1, %c0_i32_0 : i32
    scf.if %2 {
      %cst_10 = arith.constant 0.000000e+00 : f32
      %12 = vector.broadcast %cst_10 : f32 to vector<14x128xf32>
      %c0_11 = arith.constant 0 : index
      %c0_12 = arith.constant 0 : index
      %13 = vector.load %arg6[%c0_11, %c0_12] : memref<14x128xf32, #tpu.memory_space<vmem>>, vector<14x128xf32>
      tpu.vector_store %arg6[%c0_11, %c0_12], %12 {strides = array<i32>} : memref<14x128xf32, #tpu.memory_space<vmem>>, vector<14x128xf32>,
    } else {
    }
    %c0 = arith.constant 0 : index
    %c0_1 = arith.constant 0 : index
    %3 = vector.load %arg6[%c0, %c0_1] : memref<14x128xf32, #tpu.memory_space<vmem>>, vector<14x128xf32>
    %c0_2 = arith.constant 0 : index
    %c0_3 = arith.constant 0 : index
    %4 = vector.load %arg2[%c0_2, %c0_3] : memref<14x540xbf16, #tpu.memory_space<vmem>>, vector<14x540xbf16>
    %c0_4 = arith.constant 0 : index
    %c0_5 = arith.constant 0 : index
    %5 = vector.load %arg3[%c0_4, %c0_5] : memref<540x128xbf16, #tpu.memory_space<vmem>>, vector<540x128xbf16>
    %cst = arith.constant dense<0.000000e+00> : vector<14x128xf32>
    %6 = tpu.matmul %4, %5, %cst {dimension_numbers = #tpu.dot_dimension_numbers<[1], [0], [0], [1], [0, 0, 1, 1], [], []>} : vector<14x540xbf16>, vector<540x128xbf16>, vector<14x128xf32> -> vector<14x128xf32>
    %7 = arith.addf %3, %6 : vector<14x128xf32>
    %c0_6 = arith.constant 0 : index
    %c0_7 = arith.constant 0 : index
    %8 = vector.load %arg6[%c0_6, %c0_7] : memref<14x128xf32, #tpu.memory_space<vmem>>, vector<14x128xf32>
    tpu.vector_store %arg6[%c0_6, %c0_7], %7 {strides = array<i32>} : memref<14x128xf32, #tpu.memory_space<vmem>>, vector<14x128xf32>,
    %c0_i32_8 = arith.constant 0 : i32
    %9 = arith.cmpi eq, %arg1, %c0_i32_8 : i32
    %10 = arith.extui %9 : i1 to i32
    %c0_i32_9 = arith.constant 0 : i32
    %11 = arith.cmpi ne, %10, %c0_i32_9 : i32
    scf.if %11 {
      %c0_10 = arith.constant 0 : index
      %c0_11 = arith.constant 0 : index
      %12 = vector.load %arg6[%c0_10, %c0_11] : memref<14x128xf32, #tpu.memory_space<vmem>>, vector<14x128xf32>
      %c0_12 = arith.constant 0 : index
      %c0_13 = arith.constant 0 : index
      %13 = vector.load %arg4[%c0_12, %c0_13] : memref<1x128xf32, #tpu.memory_space<vmem>>, vector<1x128xf32>
      %14 = vector.broadcast %13 : vector<1x128xf32> to vector<14x128xf32>
      %15 = arith.addf %12, %14 : vector<14x128xf32>
      %cst_14 = arith.constant 0.000000e+00 : f32
      %16 = vector.broadcast %cst_14 : f32 to vector<14x128xf32>
      %17 = arith.maximumf %15, %16 : vector<14x128xf32>
      %18 = arith.truncf %17 : vector<14x128xf32> to vector<14x128xbf16>
      %c0_15 = arith.constant 0 : index
      %c0_16 = arith.constant 0 : index
      %19 = vector.load %arg5[%c0_15, %c0_16] : memref<14x128xbf16, #tpu.memory_space<vmem>>, vector<14x128xbf16>
      tpu.vector_store %arg5[%c0_15, %c0_16], %18 {strides = array<i32>} : memref<14x128xbf16, #tpu.memory_space<vmem>>, vector<14x128xbf16>,
    } else {
    }
    return
  }
  func.func @transform_0(%arg0: i32, %arg1: i32) -> (i32, i32) {
    %c0_i32 = arith.constant 0 : i32
    return %arg0, %arg1 : i32, i32
  }
  func.func @transform_1(%arg0: i32, %arg1: i32) -> (i32, i32) {
    %c0_i32 = arith.constant 0 : i32
    %c0_i32_0 = arith.constant 0 : i32
    return %arg1, %c0_i32 : i32, i32
  }
  func.func @transform_2(%arg0: i32, %arg1: i32) -> (i32, i32) {
    %c0_i32 = arith.constant 0 : i32
    %c0_i32_0 = arith.constant 0 : i32
    %c0_i32_1 = arith.constant 0 : i32
    return %c0_i32, %c0_i32_0 : i32, i32
  }
  func.func @transform_3(%arg0: i32, %arg1: i32) -> (i32, i32) {
    %c0_i32 = arith.constant 0 : i32
    %c0_i32_0 = arith.constant 0 : i32
    return %arg0, %c0_i32 : i32, i32
  }
}

module attributes {stable_mosaic.version = 11 : i64} {
  func.func @_matmul_bias_act_kernel(%arg0: i32, %arg1: i32, %arg2: memref<8x105xbf16, #tpu.memory_space<vmem>>, %arg3: memref<105x128xbf16, #tpu.memory_space<vmem>>, %arg4: memref<1x128xf32, #tpu.memory_space<vmem>>, %arg5: memref<8x128xbf16, #tpu.memory_space<vmem>>, %arg6: memref<8x128xf32, #tpu.memory_space<vmem>>) attributes {dimension_semantics = [#tpu.dimension_semantics<parallel>, #tpu.dimension_semantics<arbitrary>], iteration_bounds = array<i64: 1, 1>, scalar_prefetch = 0 : i64, scratch_operands = 1 : i64, tpu.core_type = #tpu.core_type<tc>, window_params = [{transform_indices = @transform_0, window_bounds = array<i64: 8, 105>}, {transform_indices = @transform_1, window_bounds = array<i64: 105, 128>}, {pipeline_mode = #tpu.pipeline_mode<synchronous>, transform_indices = @transform_2, window_bounds = array<i64: 1, 128>}, {transform_indices = @transform_3, window_bounds = array<i64: 8, 128>}]} {
    %c0_i32 = arith.constant 0 : i32
    %0 = arith.cmpi eq, %arg1, %c0_i32 : i32
    %1 = arith.extui %0 : i1 to i32
    %c0_i32_0 = arith.constant 0 : i32
    %2 = arith.cmpi ne, %1, %c0_i32_0 : i32
    scf.if %2 {
      %cst_10 = arith.constant 0.000000e+00 : f32
      %12 = vector.broadcast %cst_10 : f32 to vector<8x128xf32>
      %c0_11 = arith.constant 0 : index
      %c0_12 = arith.constant 0 : index
      %13 = vector.load %arg6[%c0_11, %c0_12] : memref<8x128xf32, #tpu.memory_space<vmem>>, vector<8x128xf32>
      tpu.vector_store %arg6[%c0_11, %c0_12], %12 {strides = array<i32>} : memref<8x128xf32, #tpu.memory_space<vmem>>, vector<8x128xf32>,
    } else {
    }
    %c0 = arith.constant 0 : index
    %c0_1 = arith.constant 0 : index
    %3 = vector.load %arg6[%c0, %c0_1] : memref<8x128xf32, #tpu.memory_space<vmem>>, vector<8x128xf32>
    %c0_2 = arith.constant 0 : index
    %c0_3 = arith.constant 0 : index
    %4 = vector.load %arg2[%c0_2, %c0_3] : memref<8x105xbf16, #tpu.memory_space<vmem>>, vector<8x105xbf16>
    %c0_4 = arith.constant 0 : index
    %c0_5 = arith.constant 0 : index
    %5 = vector.load %arg3[%c0_4, %c0_5] : memref<105x128xbf16, #tpu.memory_space<vmem>>, vector<105x128xbf16>
    %cst = arith.constant dense<0.000000e+00> : vector<8x128xf32>
    %6 = tpu.matmul %4, %5, %cst {dimension_numbers = #tpu.dot_dimension_numbers<[1], [0], [0], [1], [0, 0, 1, 1], [], []>} : vector<8x105xbf16>, vector<105x128xbf16>, vector<8x128xf32> -> vector<8x128xf32>
    %7 = arith.addf %3, %6 : vector<8x128xf32>
    %c0_6 = arith.constant 0 : index
    %c0_7 = arith.constant 0 : index
    %8 = vector.load %arg6[%c0_6, %c0_7] : memref<8x128xf32, #tpu.memory_space<vmem>>, vector<8x128xf32>
    tpu.vector_store %arg6[%c0_6, %c0_7], %7 {strides = array<i32>} : memref<8x128xf32, #tpu.memory_space<vmem>>, vector<8x128xf32>,
    %c0_i32_8 = arith.constant 0 : i32
    %9 = arith.cmpi eq, %arg1, %c0_i32_8 : i32
    %10 = arith.extui %9 : i1 to i32
    %c0_i32_9 = arith.constant 0 : i32
    %11 = arith.cmpi ne, %10, %c0_i32_9 : i32
    scf.if %11 {
      %c0_10 = arith.constant 0 : index
      %c0_11 = arith.constant 0 : index
      %12 = vector.load %arg6[%c0_10, %c0_11] : memref<8x128xf32, #tpu.memory_space<vmem>>, vector<8x128xf32>
      %c0_12 = arith.constant 0 : index
      %c0_13 = arith.constant 0 : index
      %13 = vector.load %arg4[%c0_12, %c0_13] : memref<1x128xf32, #tpu.memory_space<vmem>>, vector<1x128xf32>
      %14 = vector.broadcast %13 : vector<1x128xf32> to vector<8x128xf32>
      %15 = arith.addf %12, %14 : vector<8x128xf32>
      %cst_14 = arith.constant 0.000000e+00 : f32
      %16 = vector.broadcast %cst_14 : f32 to vector<8x128xf32>
      %17 = arith.maximumf %15, %16 : vector<8x128xf32>
      %18 = arith.truncf %17 : vector<8x128xf32> to vector<8x128xbf16>
      %c0_15 = arith.constant 0 : index
      %c0_16 = arith.constant 0 : index
      %19 = vector.load %arg5[%c0_15, %c0_16] : memref<8x128xbf16, #tpu.memory_space<vmem>>, vector<8x128xbf16>
      tpu.vector_store %arg5[%c0_15, %c0_16], %18 {strides = array<i32>} : memref<8x128xbf16, #tpu.memory_space<vmem>>, vector<8x128xbf16>,
    } else {
    }
    return
  }
  func.func @transform_0(%arg0: i32, %arg1: i32) -> (i32, i32) {
    %c0_i32 = arith.constant 0 : i32
    return %arg0, %arg1 : i32, i32
  }
  func.func @transform_1(%arg0: i32, %arg1: i32) -> (i32, i32) {
    %c0_i32 = arith.constant 0 : i32
    %c0_i32_0 = arith.constant 0 : i32
    return %arg1, %c0_i32 : i32, i32
  }
  func.func @transform_2(%arg0: i32, %arg1: i32) -> (i32, i32) {
    %c0_i32 = arith.constant 0 : i32
    %c0_i32_0 = arith.constant 0 : i32
    %c0_i32_1 = arith.constant 0 : i32
    return %c0_i32, %c0_i32_0 : i32, i32
  }
  func.func @transform_3(%arg0: i32, %arg1: i32) -> (i32, i32) {
    %c0_i32 = arith.constant 0 : i32
    %c0_i32_0 = arith.constant 0 : i32
    return %arg0, %c0_i32 : i32, i32
  }
}

module attributes {stable_mosaic.version = 11 : i64} {
  func.func @_matmul_bias_act_kernel(%arg0: i32, %arg1: i32, %arg2: memref<8x105xbf16, #tpu.memory_space<vmem>>, %arg3: memref<105x128xbf16, #tpu.memory_space<vmem>>, %arg4: memref<1x128xf32, #tpu.memory_space<vmem>>, %arg5: memref<8x128xbf16, #tpu.memory_space<vmem>>, %arg6: memref<8x128xf32, #tpu.memory_space<vmem>>) attributes {dimension_semantics = [#tpu.dimension_semantics<parallel>, #tpu.dimension_semantics<arbitrary>], iteration_bounds = array<i64: 1, 1>, scalar_prefetch = 0 : i64, scratch_operands = 1 : i64, tpu.core_type = #tpu.core_type<tc>, window_params = [{transform_indices = @transform_0, window_bounds = array<i64: 8, 105>}, {transform_indices = @transform_1, window_bounds = array<i64: 105, 128>}, {pipeline_mode = #tpu.pipeline_mode<synchronous>, transform_indices = @transform_2, window_bounds = array<i64: 1, 128>}, {transform_indices = @transform_3, window_bounds = array<i64: 8, 128>}]} {
    %c0_i32 = arith.constant 0 : i32
    %0 = arith.cmpi eq, %arg1, %c0_i32 : i32
    %1 = arith.extui %0 : i1 to i32
    %c0_i32_0 = arith.constant 0 : i32
    %2 = arith.cmpi ne, %1, %c0_i32_0 : i32
    scf.if %2 {
      %cst_10 = arith.constant 0.000000e+00 : f32
      %12 = vector.broadcast %cst_10 : f32 to vector<8x128xf32>
      %c0_11 = arith.constant 0 : index
      %c0_12 = arith.constant 0 : index
      %13 = vector.load %arg6[%c0_11, %c0_12] : memref<8x128xf32, #tpu.memory_space<vmem>>, vector<8x128xf32>
      tpu.vector_store %arg6[%c0_11, %c0_12], %12 {strides = array<i32>} : memref<8x128xf32, #tpu.memory_space<vmem>>, vector<8x128xf32>,
    } else {
    }
    %c0 = arith.constant 0 : index
    %c0_1 = arith.constant 0 : index
    %3 = vector.load %arg6[%c0, %c0_1] : memref<8x128xf32, #tpu.memory_space<vmem>>, vector<8x128xf32>
    %c0_2 = arith.constant 0 : index
    %c0_3 = arith.constant 0 : index
    %4 = vector.load %arg2[%c0_2, %c0_3] : memref<8x105xbf16, #tpu.memory_space<vmem>>, vector<8x105xbf16>
    %c0_4 = arith.constant 0 : index
    %c0_5 = arith.constant 0 : index
    %5 = vector.load %arg3[%c0_4, %c0_5] : memref<105x128xbf16, #tpu.memory_space<vmem>>, vector<105x128xbf16>
    %cst = arith.constant dense<0.000000e+00> : vector<8x128xf32>
    %6 = tpu.matmul %4, %5, %cst {dimension_numbers = #tpu.dot_dimension_numbers<[1], [0], [0], [1], [0, 0, 1, 1], [], []>} : vector<8x105xbf16>, vector<105x128xbf16>, vector<8x128xf32> -> vector<8x128xf32>
    %7 = arith.addf %3, %6 : vector<8x128xf32>
    %c0_6 = arith.constant 0 : index
    %c0_7 = arith.constant 0 : index
    %8 = vector.load %arg6[%c0_6, %c0_7] : memref<8x128xf32, #tpu.memory_space<vmem>>, vector<8x128xf32>
    tpu.vector_store %arg6[%c0_6, %c0_7], %7 {strides = array<i32>} : memref<8x128xf32, #tpu.memory_space<vmem>>, vector<8x128xf32>,
    %c0_i32_8 = arith.constant 0 : i32
    %9 = arith.cmpi eq, %arg1, %c0_i32_8 : i32
    %10 = arith.extui %9 : i1 to i32
    %c0_i32_9 = arith.constant 0 : i32
    %11 = arith.cmpi ne, %10, %c0_i32_9 : i32
    scf.if %11 {
      %c0_10 = arith.constant 0 : index
      %c0_11 = arith.constant 0 : index
      %12 = vector.load %arg6[%c0_10, %c0_11] : memref<8x128xf32, #tpu.memory_space<vmem>>, vector<8x128xf32>
      %c0_12 = arith.constant 0 : index
      %c0_13 = arith.constant 0 : index
      %13 = vector.load %arg4[%c0_12, %c0_13] : memref<1x128xf32, #tpu.memory_space<vmem>>, vector<1x128xf32>
      %14 = vector.broadcast %13 : vector<1x128xf32> to vector<8x128xf32>
      %15 = arith.addf %12, %14 : vector<8x128xf32>
      %16 = arith.truncf %15 : vector<8x128xf32> to vector<8x128xbf16>
      %c0_14 = arith.constant 0 : index
      %c0_15 = arith.constant 0 : index
      %17 = vector.load %arg5[%c0_14, %c0_15] : memref<8x128xbf16, #tpu.memory_space<vmem>>, vector<8x128xbf16>
      tpu.vector_store %arg5[%c0_14, %c0_15], %16 {strides = array<i32>} : memref<8x128xbf16, #tpu.memory_space<vmem>>, vector<8x128xbf16>,
    } else {
    }
    return
  }
  func.func @transform_0(%arg0: i32, %arg1: i32) -> (i32, i32) {
    %c0_i32 = arith.constant 0 : i32
    return %arg0, %arg1 : i32, i32
  }
  func.func @transform_1(%arg0: i32, %arg1: i32) -> (i32, i32) {
    %c0_i32 = arith.constant 0 : i32
    %c0_i32_0 = arith.constant 0 : i32
    return %arg1, %c0_i32 : i32, i32
  }
  func.func @transform_2(%arg0: i32, %arg1: i32) -> (i32, i32) {
    %c0_i32 = arith.constant 0 : i32
    %c0_i32_0 = arith.constant 0 : i32
    %c0_i32_1 = arith.constant 0 : i32
    return %c0_i32, %c0_i32_0 : i32, i32
  }
  func.func @transform_3(%arg0: i32, %arg1: i32) -> (i32, i32) {
    %c0_i32 = arith.constant 0 : i32
    %c0_i32_0 = arith.constant 0 : i32
    return %arg0, %c0_i32 : i32, i32
  }
}

module attributes {stable_mosaic.version = 11 : i64} {
  func.func @_matmul_bias_act_kernel(%arg0: i32, %arg1: i32, %arg2: memref<2x105xbf16, #tpu.memory_space<vmem>>, %arg3: memref<105x128xbf16, #tpu.memory_space<vmem>>, %arg4: memref<1x128xf32, #tpu.memory_space<vmem>>, %arg5: memref<2x128xf32, #tpu.memory_space<vmem>>, %arg6: memref<2x128xf32, #tpu.memory_space<vmem>>) attributes {dimension_semantics = [#tpu.dimension_semantics<parallel>, #tpu.dimension_semantics<arbitrary>], iteration_bounds = array<i64: 1, 1>, scalar_prefetch = 0 : i64, scratch_operands = 1 : i64, tpu.core_type = #tpu.core_type<tc>, window_params = [{transform_indices = @transform_0, window_bounds = array<i64: 2, 105>}, {transform_indices = @transform_1, window_bounds = array<i64: 105, 128>}, {pipeline_mode = #tpu.pipeline_mode<synchronous>, transform_indices = @transform_2, window_bounds = array<i64: 1, 128>}, {transform_indices = @transform_3, window_bounds = array<i64: 2, 128>}]} {
    %c0_i32 = arith.constant 0 : i32
    %0 = arith.cmpi eq, %arg1, %c0_i32 : i32
    %1 = arith.extui %0 : i1 to i32
    %c0_i32_0 = arith.constant 0 : i32
    %2 = arith.cmpi ne, %1, %c0_i32_0 : i32
    scf.if %2 {
      %cst_10 = arith.constant 0.000000e+00 : f32
      %12 = vector.broadcast %cst_10 : f32 to vector<2x128xf32>
      %c0_11 = arith.constant 0 : index
      %c0_12 = arith.constant 0 : index
      %13 = vector.load %arg6[%c0_11, %c0_12] : memref<2x128xf32, #tpu.memory_space<vmem>>, vector<2x128xf32>
      tpu.vector_store %arg6[%c0_11, %c0_12], %12 {strides = array<i32>} : memref<2x128xf32, #tpu.memory_space<vmem>>, vector<2x128xf32>,
    } else {
    }
    %c0 = arith.constant 0 : index
    %c0_1 = arith.constant 0 : index
    %3 = vector.load %arg6[%c0, %c0_1] : memref<2x128xf32, #tpu.memory_space<vmem>>, vector<2x128xf32>
    %c0_2 = arith.constant 0 : index
    %c0_3 = arith.constant 0 : index
    %4 = vector.load %arg2[%c0_2, %c0_3] : memref<2x105xbf16, #tpu.memory_space<vmem>>, vector<2x105xbf16>
    %c0_4 = arith.constant 0 : index
    %c0_5 = arith.constant 0 : index
    %5 = vector.load %arg3[%c0_4, %c0_5] : memref<105x128xbf16, #tpu.memory_space<vmem>>, vector<105x128xbf16>
    %cst = arith.constant dense<0.000000e+00> : vector<2x128xf32>
    %6 = tpu.matmul %4, %5, %cst {dimension_numbers = #tpu.dot_dimension_numbers<[1], [0], [0], [1], [0, 0, 1, 1], [], []>} : vector<2x105xbf16>, vector<105x128xbf16>, vector<2x128xf32> -> vector<2x128xf32>
    %7 = arith.addf %3, %6 : vector<2x128xf32>
    %c0_6 = arith.constant 0 : index
    %c0_7 = arith.constant 0 : index
    %8 = vector.load %arg6[%c0_6, %c0_7] : memref<2x128xf32, #tpu.memory_space<vmem>>, vector<2x128xf32>
    tpu.vector_store %arg6[%c0_6, %c0_7], %7 {strides = array<i32>} : memref<2x128xf32, #tpu.memory_space<vmem>>, vector<2x128xf32>,
    %c0_i32_8 = arith.constant 0 : i32
    %9 = arith.cmpi eq, %arg1, %c0_i32_8 : i32
    %10 = arith.extui %9 : i1 to i32
    %c0_i32_9 = arith.constant 0 : i32
    %11 = arith.cmpi ne, %10, %c0_i32_9 : i32
    scf.if %11 {
      %c0_10 = arith.constant 0 : index
      %c0_11 = arith.constant 0 : index
      %12 = vector.load %arg6[%c0_10, %c0_11] : memref<2x128xf32, #tpu.memory_space<vmem>>, vector<2x128xf32>
      %c0_12 = arith.constant 0 : index
      %c0_13 = arith.constant 0 : index
      %13 = vector.load %arg4[%c0_12, %c0_13] : memref<1x128xf32, #tpu.memory_space<vmem>>, vector<1x128xf32>
      %14 = vector.broadcast %13 : vector<1x128xf32> to vector<2x128xf32>
      %15 = arith.addf %12, %14 : vector<2x128xf32>
      %c0_14 = arith.constant 0 : index
      %c0_15 = arith.constant 0 : index
      %16 = vector.load %arg5[%c0_14, %c0_15] : memref<2x128xf32, #tpu.memory_space<vmem>>, vector<2x128xf32>
      tpu.vector_store %arg5[%c0_14, %c0_15], %15 {strides = array<i32>} : memref<2x128xf32, #tpu.memory_space<vmem>>, vector<2x128xf32>,
    } else {
    }
    return
  }
  func.func @transform_0(%arg0: i32, %arg1: i32) -> (i32, i32) {
    %c0_i32 = arith.constant 0 : i32
    return %arg0, %arg1 : i32, i32
  }
  func.func @transform_1(%arg0: i32, %arg1: i32) -> (i32, i32) {
    %c0_i32 = arith.constant 0 : i32
    %c0_i32_0 = arith.constant 0 : i32
    return %arg1, %c0_i32 : i32, i32
  }
  func.func @transform_2(%arg0: i32, %arg1: i32) -> (i32, i32) {
    %c0_i32 = arith.constant 0 : i32
    %c0_i32_0 = arith.constant 0 : i32
    %c0_i32_1 = arith.constant 0 : i32
    return %c0_i32, %c0_i32_0 : i32, i32
  }
  func.func @transform_3(%arg0: i32, %arg1: i32) -> (i32, i32) {
    %c0_i32 = arith.constant 0 : i32
    %c0_i32_0 = arith.constant 0 : i32
    return %arg0, %c0_i32 : i32, i32
  }
}

module attributes {stable_mosaic.version = 11 : i64} {
  func.func @_matmul_bias_act_kernel(%arg0: i32, %arg1: i32, %arg2: memref<6x70xbf16, #tpu.memory_space<vmem>>, %arg3: memref<70x128xbf16, #tpu.memory_space<vmem>>, %arg4: memref<1x128xf32, #tpu.memory_space<vmem>>, %arg5: memref<6x128xbf16, #tpu.memory_space<vmem>>, %arg6: memref<6x128xf32, #tpu.memory_space<vmem>>) attributes {dimension_semantics = [#tpu.dimension_semantics<parallel>, #tpu.dimension_semantics<arbitrary>], iteration_bounds = array<i64: 1, 1>, scalar_prefetch = 0 : i64, scratch_operands = 1 : i64, tpu.core_type = #tpu.core_type<tc>, window_params = [{transform_indices = @transform_0, window_bounds = array<i64: 6, 70>}, {transform_indices = @transform_1, window_bounds = array<i64: 70, 128>}, {pipeline_mode = #tpu.pipeline_mode<synchronous>, transform_indices = @transform_2, window_bounds = array<i64: 1, 128>}, {transform_indices = @transform_3, window_bounds = array<i64: 6, 128>}]} {
    %c0_i32 = arith.constant 0 : i32
    %0 = arith.cmpi eq, %arg1, %c0_i32 : i32
    %1 = arith.extui %0 : i1 to i32
    %c0_i32_0 = arith.constant 0 : i32
    %2 = arith.cmpi ne, %1, %c0_i32_0 : i32
    scf.if %2 {
      %cst_10 = arith.constant 0.000000e+00 : f32
      %12 = vector.broadcast %cst_10 : f32 to vector<6x128xf32>
      %c0_11 = arith.constant 0 : index
      %c0_12 = arith.constant 0 : index
      %13 = vector.load %arg6[%c0_11, %c0_12] : memref<6x128xf32, #tpu.memory_space<vmem>>, vector<6x128xf32>
      tpu.vector_store %arg6[%c0_11, %c0_12], %12 {strides = array<i32>} : memref<6x128xf32, #tpu.memory_space<vmem>>, vector<6x128xf32>,
    } else {
    }
    %c0 = arith.constant 0 : index
    %c0_1 = arith.constant 0 : index
    %3 = vector.load %arg6[%c0, %c0_1] : memref<6x128xf32, #tpu.memory_space<vmem>>, vector<6x128xf32>
    %c0_2 = arith.constant 0 : index
    %c0_3 = arith.constant 0 : index
    %4 = vector.load %arg2[%c0_2, %c0_3] : memref<6x70xbf16, #tpu.memory_space<vmem>>, vector<6x70xbf16>
    %c0_4 = arith.constant 0 : index
    %c0_5 = arith.constant 0 : index
    %5 = vector.load %arg3[%c0_4, %c0_5] : memref<70x128xbf16, #tpu.memory_space<vmem>>, vector<70x128xbf16>
    %cst = arith.constant dense<0.000000e+00> : vector<6x128xf32>
    %6 = tpu.matmul %4, %5, %cst {dimension_numbers = #tpu.dot_dimension_numbers<[1], [0], [0], [1], [0, 0, 1, 1], [], []>} : vector<6x70xbf16>, vector<70x128xbf16>, vector<6x128xf32> -> vector<6x128xf32>
    %7 = arith.addf %3, %6 : vector<6x128xf32>
    %c0_6 = arith.constant 0 : index
    %c0_7 = arith.constant 0 : index
    %8 = vector.load %arg6[%c0_6, %c0_7] : memref<6x128xf32, #tpu.memory_space<vmem>>, vector<6x128xf32>
    tpu.vector_store %arg6[%c0_6, %c0_7], %7 {strides = array<i32>} : memref<6x128xf32, #tpu.memory_space<vmem>>, vector<6x128xf32>,
    %c0_i32_8 = arith.constant 0 : i32
    %9 = arith.cmpi eq, %arg1, %c0_i32_8 : i32
    %10 = arith.extui %9 : i1 to i32
    %c0_i32_9 = arith.constant 0 : i32
    %11 = arith.cmpi ne, %10, %c0_i32_9 : i32
    scf.if %11 {
      %c0_10 = arith.constant 0 : index
      %c0_11 = arith.constant 0 : index
      %12 = vector.load %arg6[%c0_10, %c0_11] : memref<6x128xf32, #tpu.memory_space<vmem>>, vector<6x128xf32>
      %c0_12 = arith.constant 0 : index
      %c0_13 = arith.constant 0 : index
      %13 = vector.load %arg4[%c0_12, %c0_13] : memref<1x128xf32, #tpu.memory_space<vmem>>, vector<1x128xf32>
      %14 = vector.broadcast %13 : vector<1x128xf32> to vector<6x128xf32>
      %15 = arith.addf %12, %14 : vector<6x128xf32>
      %cst_14 = arith.constant 0.000000e+00 : f32
      %16 = vector.broadcast %cst_14 : f32 to vector<6x128xf32>
      %17 = arith.maximumf %15, %16 : vector<6x128xf32>
      %18 = arith.truncf %17 : vector<6x128xf32> to vector<6x128xbf16>
      %c0_15 = arith.constant 0 : index
      %c0_16 = arith.constant 0 : index
      %19 = vector.load %arg5[%c0_15, %c0_16] : memref<6x128xbf16, #tpu.memory_space<vmem>>, vector<6x128xbf16>
      tpu.vector_store %arg5[%c0_15, %c0_16], %18 {strides = array<i32>} : memref<6x128xbf16, #tpu.memory_space<vmem>>, vector<6x128xbf16>,
    } else {
    }
    return
  }
  func.func @transform_0(%arg0: i32, %arg1: i32) -> (i32, i32) {
    %c0_i32 = arith.constant 0 : i32
    return %arg0, %arg1 : i32, i32
  }
  func.func @transform_1(%arg0: i32, %arg1: i32) -> (i32, i32) {
    %c0_i32 = arith.constant 0 : i32
    %c0_i32_0 = arith.constant 0 : i32
    return %arg1, %c0_i32 : i32, i32
  }
  func.func @transform_2(%arg0: i32, %arg1: i32) -> (i32, i32) {
    %c0_i32 = arith.constant 0 : i32
    %c0_i32_0 = arith.constant 0 : i32
    %c0_i32_1 = arith.constant 0 : i32
    return %c0_i32, %c0_i32_0 : i32, i32
  }
  func.func @transform_3(%arg0: i32, %arg1: i32) -> (i32, i32) {
    %c0_i32 = arith.constant 0 : i32
    %c0_i32_0 = arith.constant 0 : i32
    return %arg0, %c0_i32 : i32, i32
  }
}

</mosaic_0001>

<llo_original>
// kernel: _lambda_.7
$region0: #{_lambda_.7}
  #allocation0 [shape = 'u32[]', space=smem, size = 0x4, offset = 0x4, fixed_abs, tag = 'smem constant byte address 0x4 - core index']
  #allocation1 [shape = 'u32[144,128]{1,0:T(1,128)}', space=vmem, size = 0x12000, scoped, tag = 'internal scratch']
  #allocation2 [shape = 'f32[128,128]{1,0:T(8,128)}', space=vmem, size = 0x10000, scoped, tag = 'scratch operand']
  %s0 = inlined_call_operand.vmem [shape: bf16[256,27], index: 0, kind: input, shape index: {}]
  %s1 = inlined_call_operand.vmem [shape: bf16[27,128], index: 1, kind: input, shape index: {}]
  %s2 = inlined_call_operand.vmem [shape: f32[1,128], index: 2, kind: input, shape index: {}]
  %s3 = inlined_call_operand.vmem [shape: bf16[256,128], index: 3, kind: output, shape index: {}]
  %s4 = sld [smem:[#allocation0]]
  $region53: #{_lambda_.7} parent=0
    _
  %s6 = ssub.s32 1, %s4
  %s7 = scalar_select 0, %s6, %s4
  loop: start=0, step=1, limit=4
  $region2: #{_lambda_.7} parent=0 // loop_pre_header
    _
  $region3: #{_lambda_.7} parent=0 // loop_header
    %s9 = sphi 0, %s13
    %p10 = scmp.ge.s32.totalorder %s9, 4
    %s16 = sphi 0, %s28
    %s17 = sphi 0, %s24
    %s18 = sphi 0, %s16
    %s19 = sphi 0, %s17
    %s20 = sphi 0, %s18
    %s21 = sphi 0, %s19
    %s33 = sphi 0, %s35
    %s36 = sphi 0, %s33
    %s37 = sphi 0, %s36
    %s53 = sphi 0, %s37
    %s59 = sphi 0, %s61
    %s62 = sphi 0, %s59
    %s63 = sphi 0, %s62
    %s79 = sphi 0, %s63
    %s83 = sphi 0, %s83
    %s85 = sphi 0, %s83
    %s86 = sphi 0, %s85
    %s100 = sphi 0, %s86
    %s106 = sphi 0, %s108
    %s109 = sphi 0, %s106
    %s110 = sphi 0, %s109
    %s126 = sphi 0, %s110
  $region4: #{_lambda_.7} parent=0 // loop_header_branch
    %12 = sbr.rel (%p10) target = $region8
  $region5: #{_lambda_.7} parent=0 // loop_body
    %s14 = ssub.s32 %s9, 1
    %s15 = ssub.s32 %s9, 2
    %s22 = sadd.s32 1, %s17
    %p23 = scmp.ge.s32.totalorder %s22, 1
    %s24 = scalar_select %p23, 0, %s22
    %s25 = sadd.s32 1, %s16
    %s26 = scalar_select %p23, %s25, %s16
    %p27 = scmp.ge.s32.totalorder %s26, 2
    %s28 = scalar_select %p27, 0, %s26
    %s29 = ssub.s32 %s16, %s28
    %s30 = ssub.s32 %s17, %s24
    %s31 = sor.u32 %s29, %s30
    %p32 = scmp.eq.s32.totalorder %s31, 0
    %s34 = sadd.s32 %s33, 1
    %s35 = scalar_select %p32, %s33, %s34
    %p38 = pneg %p32
    %p39 = scmp.eq.s32.totalorder %s9, 1
    %p40 = por %p38, %p39
    %p41 = scmp.ne.s32.totalorder %s33, %s36
    %p42 = scmp.eq.s32.totalorder %s9, 0
    %p43 = por %p41, %p42
    %p44 = scmp.ne.s32.totalorder %s33, %s36
    %p45 = scmp.eq.s32.totalorder %s14, 1
    %p46 = por %p44, %p45
    %p47 = scmp.ne.s32.totalorder %s36, %s37
    %p48 = scmp.eq.s32.totalorder %s14, 0
    %p49 = por %p47, %p48
    %p50 = scmp.ne.s32.totalorder %s36, %s37
    %p51 = scmp.eq.s32.totalorder %s15, 1
    %p52 = por %p50, %p51
    %p54 = scmp.ne.s32.totalorder %s37, %s53
    %p55 = scmp.eq.s32.totalorder %s15, 0
    %p56 = por %p54, %p55
    %s57 = ssub.s32 %s17, %s24
    %p58 = scmp.eq.s32.totalorder %s57, 0
    %s60 = sadd.s32 %s59, 1
    %s61 = scalar_select %p58, %s59, %s60
    %p64 = pneg %p58
    %p65 = scmp.eq.s32.totalorder %s9, 1
    %p66 = por %p64, %p65
    %p67 = scmp.ne.s32.totalorder %s59, %s62
    %p68 = scmp.eq.s32.totalorder %s9, 0
    %p69 = por %p67, %p68
    %p70 = scmp.ne.s32.totalorder %s59, %s62
    %p71 = scmp.eq.s32.totalorder %s14, 1
    %p72 = por %p70, %p71
    %p73 = scmp.ne.s32.totalorder %s62, %s63
    %p74 = scmp.eq.s32.totalorder %s14, 0
    %p75 = por %p73, %p74
    %p76 = scmp.ne.s32.totalorder %s62, %s63
    %p77 = scmp.eq.s32.totalorder %s15, 1
    %p78 = por %p76, %p77
    %p80 = scmp.ne.s32.totalorder %s63, %s79
    %p81 = scmp.eq.s32.totalorder %s15, 0
    %p82 = por %p80, %p81
    %s84 = sadd.s32 %s83, 1
    %p87 = scmp.eq.s32.totalorder %s9, 1
    %p88 = scmp.ne.s32.totalorder %s83, %s85
    %p89 = scmp.eq.s32.totalorder %s9, 0
    %p90 = por %p88, %p89
    %p91 = scmp.ne.s32.totalorder %s83, %s85
    %p92 = scmp.eq.s32.totalorder %s14, 1
    %p93 = por %p91, %p92
    %p94 = scmp.ne.s32.totalorder %s85, %s86
    %p95 = scmp.eq.s32.totalorder %s14, 0
    %p96 = por %p94, %p95
    %p97 = scmp.ne.s32.totalorder %s85, %s86
    %p98 = scmp.eq.s32.totalorder %s15, 1
    %p99 = por %p97, %p98
    %p101 = scmp.ne.s32.totalorder %s86, %s100
    %p102 = scmp.eq.s32.totalorder %s15, 0
    %p103 = por %p101, %p102
    %s104 = ssub.s32 %s16, %s28
    %p105 = scmp.eq.s32.totalorder %s104, 0
    %s107 = sadd.s32 %s106, 1
    %s108 = scalar_select %p105, %s106, %s107
    %p111 = pneg %p105
    %p112 = scmp.eq.s32.totalorder %s9, 1
    %p113 = por %p111, %p112
    %p114 = scmp.ne.s32.totalorder %s106, %s109
    %p115 = scmp.eq.s32.totalorder %s9, 0
    %p116 = por %p114, %p115
    %p117 = scmp.ne.s32.totalorder %s106, %s109
    %p118 = scmp.eq.s32.totalorder %s14, 1
    %p119 = por %p117, %p118
    %p120 = scmp.ne.s32.totalorder %s109, %s110
    %p121 = scmp.eq.s32.totalorder %s14, 0
    %p122 = por %p120, %p121
    %p123 = scmp.ne.s32.totalorder %s109, %s110
    %p124 = scmp.eq.s32.totalorder %s15, 1
    %p125 = por %p123, %p124
    %p127 = scmp.ne.s32.totalorder %s110, %s126
    %p128 = scmp.eq.s32.totalorder %s15, 0
    %p129 = por %p127, %p128
    %p130 = scmp.le.s32.totalorder 1, %s9
    %p131 = scmp.lt.s32.totalorder %s9, 3
    %p132 = pnand %p130, %p131
    %p133 = pneg %p132
    // Predicated region
    $region9: #{_lambda_.7} parent=5 // pred_check
      _
    $region10: #{_lambda_.7} parent=5 // pred_check_branch
      %135 = sbr.rel (%p132) target = $region12
    $region11: #{_lambda_.7} parent=5 // pred_region
      %s136 = ssub.s32 %s9, 1
      // Predicated region
      $region13: #{_lambda_.7} parent=11 // pred_check
        %p137 = pneg %p75
      $region14: #{_lambda_.7} parent=11 // pred_check_branch
        %139 = sbr.rel (%p137) target = $region16
      $region15: #{_lambda_.7} parent=11 // pred_region
        %s140 = smul.u32 4, %s19
        %p141 = scmp.lt.s32.totalorder %s140, 3
        %s142 = scalar_select %p141, %s140, 3
        %s143 = smul.addr %s142, 4
        %s144 = scalar_lea.vmem %s1, %s143
        %s145 = smul.u32 4, %s19
      $region16: #{_lambda_.7} parent=11 // pred_fallthru
        _
      // Predicated region
      $region17: #{_lambda_.7} parent=11 // pred_check
        %p146 = pneg %p96
      $region18: #{_lambda_.7} parent=11 // pred_check_branch
        %148 = sbr.rel (%p146) target = $region20
      $region19: #{_lambda_.7} parent=11 // pred_region
        _
      $region20: #{_lambda_.7} parent=11 // pred_fallthru
        _
    $region12: #{_lambda_.7} parent=5 // pred_fallthru
      _
    %p149 = scmp.lt.s32.totalorder %s9, 2
    // Predicated region
    $region21: #{_lambda_.7} parent=5 // pred_check
      %p150 = pneg %p149
    $region22: #{_lambda_.7} parent=5 // pred_check_branch
      %152 = sbr.rel (%p150) target = $region24
    $region23: #{_lambda_.7} parent=5 // pred_region
      // Predicated region
      $region25: #{_lambda_.7} parent=23 // pred_check
        %p153 = pneg %p43
      $region26: #{_lambda_.7} parent=23 // pred_check_branch
        %155 = sbr.rel (%p153) target = $region28
      $region27: #{_lambda_.7} parent=23 // pred_region
        %s156 = smul.u32 16, %s16
        %p157 = scmp.lt.s32.totalorder %s156, 31
        %s158 = scalar_select %p157, %s156, 31
        %p159 = scmp.lt.s32.totalorder %s17, 0
        %s160 = scalar_select %p159, %s17, 0
        %s161 = sadd.s32 %s160, %s158
        %s162 = smul.addr %s161, 4
        %s163 = scalar_lea.vmem %s0, %s162
        %s164 = smul.u32 16, %s16
      $region28: #{_lambda_.7} parent=23 // pred_fallthru
        _
    $region24: #{_lambda_.7} parent=5 // pred_fallthru
      _
    %p165 = scmp.le.s32.totalorder 1, %s9
    %p166 = scmp.lt.s32.totalorder %s9, 3
    %p167 = pnand %p165, %p166
    %p168 = pneg %p167
    // Predicated region
    $region29: #{_lambda_.7} parent=5 // pred_check
      _
    $region30: #{_lambda_.7} parent=5 // pred_check_branch
      %170 = sbr.rel (%p167) target = $region32
    $region31: #{_lambda_.7} parent=5 // pred_region
      %s171 = ssub.s32 %s9, 1
      %s172 = smul.u32 16, %s18
      %p173 = scmp.lt.s32.totalorder %s172, 31
      %s174 = scalar_select %p173, %s172, 31
      %p175 = scmp.lt.s32.totalorder %s19, 0
      %s176 = scalar_select %p175, %s19, 0
      %s177 = sadd.s32 %s176, %s174
      %s178 = smul.addr %s177, 4
      %s179 = scalar_lea.vmem %s0, %s178
      %p180 = pneg %p49
      %p181 = pneg %p46
      %s182 = smul.u32 4, %s19
      %p183 = scmp.lt.s32.totalorder %s182, 3
      %s184 = scalar_select %p183, %s182, 3
      %s185 = smul.addr %s184, 4
      %s186 = scalar_lea.vmem %s1, %s185
      %p187 = pneg %p75
      %p188 = pneg %p72
      %p189 = pneg %p96
      %p190 = pneg %p93
      %p191 = pneg %p122
      %p192 = pneg %p119
      %s193 = smul.u32 16, %s18
      %p194 = scmp.lt.s32.totalorder %s193, 31
      %s195 = scalar_select %p194, %s193, 31
      %s196 = smul.addr %s195, 4
      %s197 = scalar_lea.vmem %s3, %s196
      %s198 = smul.u32 16, %s18
      %p199 = scmp.lt.s32.totalorder %s198, 31
      %s200 = scalar_select %p199, %s198, 31
      %p201 = scmp.lt.s32.totalorder %s19, 0
      %s202 = scalar_select %p201, %s19, 0
      %s203 = sadd.s32 %s202, %s200
      %s204 = smul.addr %s203, 4
      %s205 = scalar_lea.vmem %s0, %s204
      %s206 = smul.u32 16, %s18
      %s207 = smul.u32 4, %s19
      %p208 = scmp.lt.s32.totalorder %s207, 3
      %s209 = scalar_select %p208, %s207, 3
      %s210 = smul.addr %s209, 4
      %s211 = scalar_lea.vmem %s1, %s210
      %s212 = smul.u32 4, %s19
      %s213 = smul.u32 16, %s18
      %p214 = scmp.lt.s32.totalorder %s213, 31
      %s215 = scalar_select %p214, %s213, 31
      %s216 = smul.addr %s215, 4
      %s217 = scalar_lea.vmem %s3, %s216
      %s218 = smul.u32 16, %s18
      %p220 = scmp.eq.s32.totalorder %s19, 0
      // Predicated region
      $region33: #{_lambda_.7} parent=31 // pred_check
        %p221 = pneg %p220
      $region34: #{_lambda_.7} parent=31 // pred_check_branch
        %223 = sbr.rel (%p221) target = $region36
      $region35: #{_lambda_.7} parent=31 // pred_region
        %224 = vst [vmem:[#allocation2] sm:$0xff] 0.0
        %225 = vst [vmem:[#allocation2 + $0x8] sm:$0xff] 0.0
        %226 = vst [vmem:[#allocation2 + $0x10] sm:$0xff] 0.0
        %227 = vst [vmem:[#allocation2 + $0x18] sm:$0xff] 0.0
        %228 = vst [vmem:[#allocation2 + $0x20] sm:$0xff] 0.0
        %229 = vst [vmem:[#allocation2 + $0x28] sm:$0xff] 0.0
        %230 = vst [vmem:[#allocation2 + $0x30] sm:$0xff] 0.0
        %231 = vst [vmem:[#allocation2 + $0x38] sm:$0xff] 0.0
        %232 = vst [vmem:[#allocation2 + $0x40] sm:$0xff] 0.0
        %233 = vst [vmem:[#allocation2 + $0x48] sm:$0xff] 0.0
        %234 = vst [vmem:[#allocation2 + $0x50] sm:$0xff] 0.0
        %235 = vst [vmem:[#allocation2 + $0x58] sm:$0xff] 0.0
        %236 = vst [vmem:[#allocation2 + $0x60] sm:$0xff] 0.0
        %237 = vst [vmem:[#allocation2 + $0x68] sm:$0xff] 0.0
        %238 = vst [vmem:[#allocation2 + $0x70] sm:$0xff] 0.0
        %239 = vst [vmem:[#allocation2 + $0x78] sm:$0xff] 0.0
      $region36: #{_lambda_.7} parent=31 // pred_fallthru
        _
      %v240 = vld [vmem:[#allocation2] sm:$0xff]
      %v241 = vld [vmem:[#allocation2 + $0x8] sm:$0xff]
      %v242 = vld [vmem:[#allocation2 + $0x10] sm:$0xff]
      %v243 = vld [vmem:[#allocation2 + $0x18] sm:$0xff]
      %v244 = vld [vmem:[#allocation2 + $0x20] sm:$0xff]
      %v245 = vld [vmem:[#allocation2 + $0x28] sm:$0xff]
      %v246 = vld [vmem:[#allocation2 + $0x30] sm:$0xff]
      %v247 = vld [vmem:[#allocation2 + $0x38] sm:$0xff]
      %v248 = vld [vmem:[#allocation2 + $0x40] sm:$0xff]
      %v249 = vld [vmem:[#allocation2 + $0x48] sm:$0xff]
      %v250 = vld [vmem:[#allocation2 + $0x50] sm:$0xff]
      %v251 = vld [vmem:[#allocation2 + $0x58] sm:$0xff]
      %v252 = vld [vmem:[#allocation2 + $0x60] sm:$0xff]
      %v253 = vld [vmem:[#allocation2 + $0x68] sm:$0xff]
      %v254 = vld [vmem:[#allocation2 + $0x70] sm:$0xff]
      %v255 = vld [vmem:[#allocation2 + $0x78] sm:$0xff]
      %v256 = vld [vmem:[%s205] sm:$0xf]
      %v257 = vld [vmem:[%s205 + $0x4] sm:$0xf]
      %v258 = vld [vmem:[%s205 + $0x8] sm:$0xf]
      %v259 = vld [vmem:[%s205 + $0xc] sm:$0xf]
      %v260 = vld [vmem:[%s205 + $0x10] sm:$0xf]
      %v261 = vld [vmem:[%s205 + $0x14] sm:$0xf]
      %v262 = vld [vmem:[%s205 + $0x18] sm:$0xf]
      %v263 = vld [vmem:[%s205 + $0x1c] sm:$0xf]
      %v264 = vld [vmem:[%s205 + $0x20] sm:$0xf]
      %v265 = vld [vmem:[%s205 + $0x24] sm:$0xf]
      %v266 = vld [vmem:[%s205 + $0x28] sm:$0xf]
      %v267 = vld [vmem:[%s205 + $0x2c] sm:$0xf]
      %v268 = vld [vmem:[%s205 + $0x30] sm:$0xf]
      %v269 = vld [vmem:[%s205 + $0x34] sm:$0xf]
      %v270 = vld [vmem:[%s205 + $0x38] sm:$0xf]
      %v271 = vld [vmem:[%s205 + $0x3c] sm:$0xf]
      %v272 = vld [vmem:[%s211] sm:$0xf]
      %v273 = vld [vmem:[%s211 + $0x4] sm:$0xf]
      %v274 = vld [vmem:[%s211 + $0x8] sm:$0xf]
      %v275 = vld [vmem:[%s211 + $0xc] sm:$0x3]
      %v292 = vunpack.c.l.b16 %v256
      %v293 = vunpack.c.l.b16 %v257
      %v294 = vunpack.c.l.b16 %v258
      %v295 = vunpack.c.l.b16 %v259
      %v296 = vunpack.c.l.b16 %v260
      %v297 = vunpack.c.l.b16 %v261
      %v298 = vunpack.c.l.b16 %v262
      %v299 = vunpack.c.l.b16 %v263
      %v300 = vunpack.c.l.b16 %v264
      %v301 = vunpack.c.l.b16 %v265
      %v302 = vunpack.c.l.b16 %v266
      %v303 = vunpack.c.l.b16 %v267
      %v304 = vunpack.c.l.b16 %v268
      %v305 = vunpack.c.l.b16 %v269
      %v306 = vunpack.c.l.b16 %v270
      %v307 = vunpack.c.l.b16 %v271
      %v308 = vpack.c.b16 %v293, %v292
      %v309 = vpack.c.b16 %v295, %v294
      %v310 = vpack.c.b16 %v297, %v296
      %v311 = vpack.c.b16 %v299, %v298
      %v312 = vpack.c.b16 %v301, %v300
      %v313 = vpack.c.b16 %v303, %v302
      %v314 = vpack.c.b16 %v305, %v304
      %v315 = vpack.c.b16 %v307, %v306
      %v320 = vunpack.c.l.b16 %v272
      %v321 = vunpack.c.l.b16 %v273
      %v322 = vunpack.c.l.b16 %v274
      %v323 = vunpack.c.l.b16 %v275
      %v324 = vpack.c.b16 %v321, %v320
      %v325 = vpack.c.b16 %v323, %v322
      %vm327 = vcmask 220160
      %v329 = vsel %vm327, %v308, 0
      %v332 = vsel %vm327, %v309, 0
      %v335 = vsel %vm327, %v310, 0
      %v338 = vsel %vm327, %v311, 0
      %v341 = vsel %vm327, %v312, 0
      %v344 = vsel %vm327, %v313, 0
      %v347 = vsel %vm327, %v314, 0
      %v350 = vsel %vm327, %v315, 0
      %vm352 = vcmask 1044480
      %vm353 = vcmask 1045504
      %v354 = vsel %vm352, 4294967295, 65535
      %v355 = vsel %vm353, %v354, 0
      %v357 = vand.u32 %v325, %v355
      %359 = vmatprep.subr.bf16.mxu0 0
      %360 = vmatpush1.bf16.msra.mxu0 %v324
      %361 = vmatprep.subr.bf16.mxu0 0
      %362 = vmatpush1.bf16.msra.mxu0 %v357
      %363 = vmatprep.subr.bf16.mxu0 0
      %364 = vmatpush1.bf16.msra.mxu0 0
      %365 = vmatprep.subr.bf16.mxu0 0
      %366 = vmatpush1.bf16.msra.mxu0 0
      %367 = vmatprep.subr.bf16.mxu0 0
      %368 = vmatpush1.bf16.msra.mxu0 0
      %369 = vmatprep.subr.bf16.mxu0 0
      %370 = vmatpush1.bf16.msra.mxu0 0
      %371 = vmatprep.subr.bf16.mxu0 0
      %372 = vmatpush1.bf16.msra.mxu0 0
      %373 = vmatprep.subr.bf16.mxu0 0
      %374 = vmatpush1.bf16.msra.mxu0 0
      %375 = vmatprep.subr.bf16.mxu0 0
      %376 = vmatpush1.bf16.msra.mxu0 0
      %377 = vmatprep.subr.bf16.mxu0 0
      %378 = vmatpush1.bf16.msra.mxu0 0
      %379 = vmatprep.subr.bf16.mxu0 0
      %380 = vmatpush1.bf16.msra.mxu0 0
      %381 = vmatprep.subr.bf16.mxu0 0
      %382 = vmatpush1.bf16.msra.mxu0 0
      %383 = vmatprep.subr.bf16.mxu0 0
      %384 = vmatpush1.bf16.msra.mxu0 0
      %385 = vmatprep.subr.bf16.mxu0 0
      %386 = vmatpush1.bf16.msra.mxu0 0
      %387 = vmatprep.subr.bf16.mxu0 0
      %388 = vmatpush1.bf16.msra.mxu0 0
      %389 = vmatprep.subr.bf16.mxu0 0
      %390 = vmatpush1.bf16.msra.mxu0 0
      %391 = vmatprep.mubr.bf16.mxu0 0
      %392 = vmatmul.mubr.bf16.gmra.mrb[0].mxu0 %v329
      %v393 = vpop.f32.mrb[0].mxu0
      %v394 = vadd.f32 0.0, %v393
      %v395 = vpop.f32.mrb[0].mxu0
      %v396 = vpop.f32.mrb[0].mxu0
      %v397 = vadd.f32 0.0, %v396
      %v398 = vpop.f32.mrb[0].mxu0
      %399 = vmatprep.mubr.bf16.mxu0 0
      %400 = vmatmul.mubr.bf16.gmra.mrb[0].mxu0 %v332
      %v401 = vpop.f32.mrb[0].mxu0
      %v402 = vadd.f32 0.0, %v401
      %v403 = vpop.f32.mrb[0].mxu0
      %v404 = vpop.f32.mrb[0].mxu0
      %v405 = vadd.f32 0.0, %v404
      %v406 = vpop.f32.mrb[0].mxu0
      %407 = vmatprep.mubr.bf16.mxu0 0
      %408 = vmatmul.mubr.bf16.gmra.mrb[0].mxu0 %v335
      %v409 = vpop.f32.mrb[0].mxu0
      %v410 = vadd.f32 0.0, %v409
      %v411 = vpop.f32.mrb[0].mxu0
      %v412 = vpop.f32.mrb[0].mxu0
      %v413 = vadd.f32 0.0, %v412
      %v414 = vpop.f32.mrb[0].mxu0
      %415 = vmatprep.mubr.bf16.mxu0 0
      %416 = vmatmul.mubr.bf16.gmra.mrb[0].mxu0 %v338
      %v417 = vpop.f32.mrb[0].mxu0
      %v418 = vadd.f32 0.0, %v417
      %v419 = vpop.f32.mrb[0].mxu0
      %v420 = vpop.f32.mrb[0].mxu0
      %v421 = vadd.f32 0.0, %v420
      %v422 = vpop.f32.mrb[0].mxu0
      %423 = vmatprep.mubr.bf16.mxu0 0
      %424 = vmatmul.mubr.bf16.gmra.mrb[0].mxu0 %v341
      %v425 = vpop.f32.mrb[0].mxu0
      %v426 = vadd.f32 0.0, %v425
      %v427 = vpop.f32.mrb[0].mxu0
      %v428 = vpop.f32.mrb[0].mxu0
      %v429 = vadd.f32 0.0, %v428
      %v430 = vpop.f32.mrb[0].mxu0
      %431 = vmatprep.mubr.bf16.mxu0 0
      %432 = vmatmul.mubr.bf16.gmra.mrb[0].mxu0 %v344
      %v433 = vpop.f32.mrb[0].mxu0
      %v434 = vadd.f32 0.0, %v433
      %v435 = vpop.f32.mrb[0].mxu0
      %v436 = vpop.f32.mrb[0].mxu0
      %v437 = vadd.f32 0.0, %v436
      %v438 = vpop.f32.mrb[0].mxu0
      %439 = vmatprep.mubr.bf16.mxu0 0
      %440 = vmatmul.mubr.bf16.gmra.mrb[0].mxu0 %v347
      %v441 = vpop.f32.mrb[0].mxu0
      %v442 = vadd.f32 0.0, %v441
      %v443 = vpop.f32.mrb[0].mxu0
      %v444 = vpop.f32.mrb[0].mxu0
      %v445 = vadd.f32 0.0, %v444
      %v446 = vpop.f32.mrb[0].mxu0
      %447 = vmatprep.mubr.bf16.mxu0 0
      %448 = vmatmul.mubr.bf16.gmra.mrb[0].mxu0 %v350
      %v449 = vpop.f32.mrb[0].mxu0
      %v450 = vadd.f32 0.0, %v449
      %v451 = vpop.f32.mrb[0].mxu0
      %v452 = vpop.f32.mrb[0].mxu0
      %v453 = vadd.f32 0.0, %v452
      %v454 = vpop.f32.mrb[0].mxu0
      %455 = vdwg.mxu0
      %v456 = vadd.f32 %v240, %v394
      %v457 = vadd.f32 %v241, %v397
      %v458 = vadd.f32 %v242, %v402
      %v459 = vadd.f32 %v243, %v405
      %v460 = vadd.f32 %v244, %v410
      %v461 = vadd.f32 %v245, %v413
      %v462 = vadd.f32 %v246, %v418
      %v463 = vadd.f32 %v247, %v421
      %v464 = vadd.f32 %v248, %v426
      %v465 = vadd.f32 %v249, %v429
      %v466 = vadd.f32 %v250, %v434
      %v467 = vadd.f32 %v251, %v437
      %v468 = vadd.f32 %v252, %v442
      %v469 = vadd.f32 %v253, %v445
      %v470 = vadd.f32 %v254, %v450
      %v471 = vadd.f32 %v255, %v453
      %472 = vst [vmem:[#allocation2] sm:$0xff] %v456
      %473 = vst [vmem:[#allocation2 + $0x8] sm:$0xff] %v457
      %474 = vst [vmem:[#allocation2 + $0x10] sm:$0xff] %v458
      %475 = vst [vmem:[#allocation2 + $0x18] sm:$0xff] %v459
      %476 = vst [vmem:[#allocation2 + $0x20] sm:$0xff] %v460
      %477 = vst [vmem:[#allocation2 + $0x28] sm:$0xff] %v461
      %478 = vst [vmem:[#allocation2 + $0x30] sm:$0xff] %v462
      %479 = vst [vmem:[#allocation2 + $0x38] sm:$0xff] %v463
      %480 = vst [vmem:[#allocation2 + $0x40] sm:$0xff] %v464
      %481 = vst [vmem:[#allocation2 + $0x48] sm:$0xff] %v465
      %482 = vst [vmem:[#allocation2 + $0x50] sm:$0xff] %v466
      %483 = vst [vmem:[#allocation2 + $0x58] sm:$0xff] %v467
      %484 = vst [vmem:[#allocation2 + $0x60] sm:$0xff] %v468
      %485 = vst [vmem:[#allocation2 + $0x68] sm:$0xff] %v469
      %486 = vst [vmem:[#allocation2 + $0x70] sm:$0xff] %v470
      %487 = vst [vmem:[#allocation2 + $0x78] sm:$0xff] %v471
      // Predicated region
      $region37: #{_lambda_.7} parent=31 // pred_check
        %p488 = pneg %p220
      $region38: #{_lambda_.7} parent=31 // pred_check_branch
        %490 = sbr.rel (%p488) target = $region40
      $region39: #{_lambda_.7} parent=31 // pred_region
        %v491 = vld [vmem:[#allocation2] sm:$0xff]
        %v492 = vld [vmem:[#allocation2 + $0x8] sm:$0xff]
        %v493 = vld [vmem:[#allocation2 + $0x10] sm:$0xff]
        %v494 = vld [vmem:[#allocation2 + $0x18] sm:$0xff]
        %v495 = vld [vmem:[#allocation2 + $0x20] sm:$0xff]
        %v496 = vld [vmem:[#allocation2 + $0x28] sm:$0xff]
        %v497 = vld [vmem:[#allocation2 + $0x30] sm:$0xff]
        %v498 = vld [vmem:[#allocation2 + $0x38] sm:$0xff]
        %v499 = vld [vmem:[#allocation2 + $0x40] sm:$0xff]
        %v500 = vld [vmem:[#allocation2 + $0x48] sm:$0xff]
        %v501 = vld [vmem:[#allocation2 + $0x50] sm:$0xff]
        %v502 = vld [vmem:[#allocation2 + $0x58] sm:$0xff]
        %v503 = vld [vmem:[#allocation2 + $0x60] sm:$0xff]
        %v504 = vld [vmem:[#allocation2 + $0x68] sm:$0xff]
        %v505 = vld [vmem:[#allocation2 + $0x70] sm:$0xff]
        %v506 = vld [vmem:[#allocation2 + $0x78] sm:$0xff]
        %v507 = vld [vmem:[%s2] sm:$0x1]
        %v509 = vlaneseq
        %v510 = vshrl.u32 %v509, 7
        %v511 = vsub.s32 0, %v510
        %v512 = vrot.slane %v507, %v511
        %v514 = vadd.f32 %v491, %v512
        %v515 = vadd.f32 %v492, %v512
        %v516 = vadd.f32 %v493, %v512
        %v517 = vadd.f32 %v494, %v512
        %v518 = vadd.f32 %v495, %v512
        %v519 = vadd.f32 %v496, %v512
        %v520 = vadd.f32 %v497, %v512
        %v521 = vadd.f32 %v498, %v512
        %v522 = vadd.f32 %v499, %v512
        %v523 = vadd.f32 %v500, %v512
        %v524 = vadd.f32 %v501, %v512
        %v525 = vadd.f32 %v502, %v512
        %v526 = vadd.f32 %v503, %v512
        %v527 = vadd.f32 %v504, %v512
        %v528 = vadd.f32 %v505, %v512
        %v529 = vadd.f32 %v506, %v512
        %v530 = vmax.f32 %v514, 0.0
        %v531 = vmax.f32 %v515, 0.0
        %v532 = vmax.f32 %v516, 0.0
        %v533 = vmax.f32 %v517, 0.0
        %v534 = vmax.f32 %v518, 0.0
        %v535 = vmax.f32 %v519, 0.0
        %v536 = vmax.f32 %v520, 0.0
        %v537 = vmax.f32 %v521, 0.0
        %v538 = vmax.f32 %v522, 0.0
        %v539 = vmax.f32 %v523, 0.0
        %v540 = vmax.f32 %v524, 0.0
        %v541 = vmax.f32 %v525, 0.0
        %v542 = vmax.f32 %v526, 0.0
        %v543 = vmax.f32 %v527, 0.0
        %v544 = vmax.f32 %v528, 0.0
        %v545 = vmax.f32 %v529, 0.0
        %v546 = vpack.c.bf16 %v531, %v530
        %v547 = vpack.c.bf16 %v533, %v532
        %v548 = vpack.c.bf16 %v535, %v534
        %v549 = vpack.c.bf16 %v537, %v536
        %v550 = vpack.c.bf16 %v539, %v538
        %v551 = vpack.c.bf16 %v541, %v540
        %v552 = vpack.c.bf16 %v543, %v542
        %v553 = vpack.c.bf16 %v545, %v544
        %v562 = vunpack.c.l.b16 %v546
        %v563 = vunpack.c.h.b16 %v546
        %v564 = vunpack.c.l.b16 %v547
        %v565 = vunpack.c.h.b16 %v547
        %v566 = vunpack.c.l.b16 %v548
        %v567 = vunpack.c.h.b16 %v548
        %v568 = vunpack.c.l.b16 %v549
        %v569 = vunpack.c.h.b16 %v549
        %v570 = vunpack.c.l.b16 %v550
        %v571 = vunpack.c.h.b16 %v550
        %v572 = vunpack.c.l.b16 %v551
        %v573 = vunpack.c.h.b16 %v551
        %v574 = vunpack.c.l.b16 %v552
        %v575 = vunpack.c.h.b16 %v552
        %v576 = vunpack.c.l.b16 %v553
        %v577 = vunpack.c.h.b16 %v553
        %v578 = vpack.c.b16 %v562, %v562
        %v579 = vpack.c.b16 %v563, %v563
        %v580 = vpack.c.b16 %v564, %v564
        %v581 = vpack.c.b16 %v565, %v565
        %v582 = vpack.c.b16 %v566, %v566
        %v583 = vpack.c.b16 %v567, %v567
        %v584 = vpack.c.b16 %v568, %v568
        %v585 = vpack.c.b16 %v569, %v569
        %v586 = vpack.c.b16 %v570, %v570
        %v587 = vpack.c.b16 %v571, %v571
        %v588 = vpack.c.b16 %v572, %v572
        %v589 = vpack.c.b16 %v573, %v573
        %v590 = vpack.c.b16 %v574, %v574
        %v591 = vpack.c.b16 %v575, %v575
        %v592 = vpack.c.b16 %v576, %v576
        %v593 = vpack.c.b16 %v577, %v577
        %610 = vst [vmem:[%s217] sm:$0xf] %v578
        %611 = vst [vmem:[%s217 + $0x4] sm:$0xf] %v579
        %612 = vst [vmem:[%s217 + $0x8] sm:$0xf] %v580
        %613 = vst [vmem:[%s217 + $0xc] sm:$0xf] %v581
        %614 = vst [vmem:[%s217 + $0x10] sm:$0xf] %v582
        %615 = vst [vmem:[%s217 + $0x14] sm:$0xf] %v583
        %616 = vst [vmem:[%s217 + $0x18] sm:$0xf] %v584
        %617 = vst [vmem:[%s217 + $0x1c] sm:$0xf] %v585
        %618 = vst [vmem:[%s217 + $0x20] sm:$0xf] %v586
        %619 = vst [vmem:[%s217 + $0x24] sm:$0xf] %v587
        %620 = vst [vmem:[%s217 + $0x28] sm:$0xf] %v588
        %621 = vst [vmem:[%s217 + $0x2c] sm:$0xf] %v589
        %622 = vst [vmem:[%s217 + $0x30] sm:$0xf] %v590
        %623 = vst [vmem:[%s217 + $0x34] sm:$0xf] %v591
        %624 = vst [vmem:[%s217 + $0x38] sm:$0xf] %v592
        %625 = vst [vmem:[%s217 + $0x3c] sm:$0xf] %v593
      $region40: #{_lambda_.7} parent=31 // pred_fallthru
        _
      %s626 = smul.u32 16, %s18
      %p627 = scmp.lt.s32.totalorder %s626, 31
      %s628 = scalar_select %p627, %s626, 31
      %s629 = smul.addr %s628, 4
      %s630 = scalar_lea.vmem %s3, %s629
      // Predicated region
      $region41: #{_lambda_.7} parent=31 // pred_check
        %p631 = pneg %p119
      $region42: #{_lambda_.7} parent=31 // pred_check_branch
        %633 = sbr.rel (%p631) target = $region44
      $region43: #{_lambda_.7} parent=31 // pred_region
        %s634 = smul.u32 16, %s18
      $region44: #{_lambda_.7} parent=31 // pred_fallthru
        _
    $region32: #{_lambda_.7} parent=5 // pred_fallthru
      _
    %p635 = scmp.le.s32.totalorder 2, %s9
    // Predicated region
    $region45: #{_lambda_.7} parent=5 // pred_check
      %p636 = pneg %p635
    $region46: #{_lambda_.7} parent=5 // pred_check_branch
      %638 = sbr.rel (%p636) target = $region48
    $region47: #{_lambda_.7} parent=5 // pred_region
      %s639 = ssub.s32 %s9, 2
      // Predicated region
      $region49: #{_lambda_.7} parent=47 // pred_check
        %p640 = pneg %p125
      $region50: #{_lambda_.7} parent=47 // pred_check_branch
        %642 = sbr.rel (%p640) target = $region52
      $region51: #{_lambda_.7} parent=47 // pred_region
        %s643 = smul.u32 16, %s20
        %p644 = scmp.lt.s32.totalorder %s643, 31
        %s645 = scalar_select %p644, %s643, 31
        %s646 = smul.addr %s645, 4
        %s647 = scalar_lea.vmem %s3, %s646
      $region52: #{_lambda_.7} parent=47 // pred_fallthru
        _
    $region48: #{_lambda_.7} parent=5 // pred_fallthru
      _
  $region6: #{_lambda_.7} parent=0 // loop_footer
    %s13 = sadd.s32 1, %s9
  $region7: #{_lambda_.7} parent=0 // loop_footer_branch
    %8 = sbr.rel target = $region3
  $region8: #{_lambda_.7} parent=0 // loop_exit
    _

// kernel: _lambda_.8
$region0: #{_lambda_.8}
  #allocation0 [shape = 'u32[]', space=smem, size = 0x4, offset = 0x4, fixed_abs, tag = 'smem constant byte address 0x4 - core index']
  #allocation1 [shape = 'u32[144,128]{1,0:T(1,128)}', space=vmem, size = 0x12000, scoped, tag = 'internal scratch']
  #allocation2 [shape = 'f32[64,128]{1,0:T(8,128)}', space=vmem, size = 0x8000, scoped, tag = 'scratch operand']
  %s0 = inlined_call_operand.vmem [shape: bf16[128,60], index: 0, kind: input, shape index: {}]
  %s1 = inlined_call_operand.vmem [shape: bf16[60,128], index: 1, kind: input, shape index: {}]
  %s2 = inlined_call_operand.vmem [shape: f32[1,128], index: 2, kind: input, shape index: {}]
  %s3 = inlined_call_operand.vmem [shape: bf16[128,128], index: 3, kind: output, shape index: {}]
  %s4 = sld [smem:[#allocation0]]
  $region53: #{_lambda_.8} parent=0
    _
  %s6 = ssub.s32 1, %s4
  %s7 = scalar_select 0, %s6, %s4
  loop: start=0, step=1, limit=4
  $region2: #{_lambda_.8} parent=0 // loop_pre_header
    _
  $region3: #{_lambda_.8} parent=0 // loop_header
    %s9 = sphi 0, %s13
    %p10 = scmp.ge.s32.totalorder %s9, 4
    %s16 = sphi 0, %s28
    %s17 = sphi 0, %s24
    %s18 = sphi 0, %s16
    %s19 = sphi 0, %s17
    %s20 = sphi 0, %s18
    %s21 = sphi 0, %s19
    %s33 = sphi 0, %s35
    %s36 = sphi 0, %s33
    %s37 = sphi 0, %s36
    %s53 = sphi 0, %s37
    %s59 = sphi 0, %s61
    %s62 = sphi 0, %s59
    %s63 = sphi 0, %s62
    %s79 = sphi 0, %s63
    %s83 = sphi 0, %s83
    %s85 = sphi 0, %s83
    %s86 = sphi 0, %s85
    %s100 = sphi 0, %s86
    %s106 = sphi 0, %s108
    %s109 = sphi 0, %s106
    %s110 = sphi 0, %s109
    %s126 = sphi 0, %s110
  $region4: #{_lambda_.8} parent=0 // loop_header_branch
    %12 = sbr.rel (%p10) target = $region8
  $region5: #{_lambda_.8} parent=0 // loop_body
    %s14 = ssub.s32 %s9, 1
    %s15 = ssub.s32 %s9, 2
    %s22 = sadd.s32 1, %s17
    %p23 = scmp.ge.s32.totalorder %s22, 1
    %s24 = scalar_select %p23, 0, %s22
    %s25 = sadd.s32 1, %s16
    %s26 = scalar_select %p23, %s25, %s16
    %p27 = scmp.ge.s32.totalorder %s26, 2
    %s28 = scalar_select %p27, 0, %s26
    %s29 = ssub.s32 %s16, %s28
    %s30 = ssub.s32 %s17, %s24
    %s31 = sor.u32 %s29, %s30
    %p32 = scmp.eq.s32.totalorder %s31, 0
    %s34 = sadd.s32 %s33, 1
    %s35 = scalar_select %p32, %s33, %s34
    %p38 = pneg %p32
    %p39 = scmp.eq.s32.totalorder %s9, 1
    %p40 = por %p38, %p39
    %p41 = scmp.ne.s32.totalorder %s33, %s36
    %p42 = scmp.eq.s32.totalorder %s9, 0
    %p43 = por %p41, %p42
    %p44 = scmp.ne.s32.totalorder %s33, %s36
    %p45 = scmp.eq.s32.totalorder %s14, 1
    %p46 = por %p44, %p45
    %p47 = scmp.ne.s32.totalorder %s36, %s37
    %p48 = scmp.eq.s32.totalorder %s14, 0
    %p49 = por %p47, %p48
    %p50 = scmp.ne.s32.totalorder %s36, %s37
    %p51 = scmp.eq.s32.totalorder %s15, 1
    %p52 = por %p50, %p51
    %p54 = scmp.ne.s32.totalorder %s37, %s53
    %p55 = scmp.eq.s32.totalorder %s15, 0
    %p56 = por %p54, %p55
    %s57 = ssub.s32 %s17, %s24
    %p58 = scmp.eq.s32.totalorder %s57, 0
    %s60 = sadd.s32 %s59, 1
    %s61 = scalar_select %p58, %s59, %s60
    %p64 = pneg %p58
    %p65 = scmp.eq.s32.totalorder %s9, 1
    %p66 = por %p64, %p65
    %p67 = scmp.ne.s32.totalorder %s59, %s62
    %p68 = scmp.eq.s32.totalorder %s9, 0
    %p69 = por %p67, %p68
    %p70 = scmp.ne.s32.totalorder %s59, %s62
    %p71 = scmp.eq.s32.totalorder %s14, 1
    %p72 = por %p70, %p71
    %p73 = scmp.ne.s32.totalorder %s62, %s63
    %p74 = scmp.eq.s32.totalorder %s14, 0
    %p75 = por %p73, %p74
    %p76 = scmp.ne.s32.totalorder %s62, %s63
    %p77 = scmp.eq.s32.totalorder %s15, 1
    %p78 = por %p76, %p77
    %p80 = scmp.ne.s32.totalorder %s63, %s79
    %p81 = scmp.eq.s32.totalorder %s15, 0
    %p82 = por %p80, %p81
    %s84 = sadd.s32 %s83, 1
    %p87 = scmp.eq.s32.totalorder %s9, 1
    %p88 = scmp.ne.s32.totalorder %s83, %s85
    %p89 = scmp.eq.s32.totalorder %s9, 0
    %p90 = por %p88, %p89
    %p91 = scmp.ne.s32.totalorder %s83, %s85
    %p92 = scmp.eq.s32.totalorder %s14, 1
    %p93 = por %p91, %p92
    %p94 = scmp.ne.s32.totalorder %s85, %s86
    %p95 = scmp.eq.s32.totalorder %s14, 0
    %p96 = por %p94, %p95
    %p97 = scmp.ne.s32.totalorder %s85, %s86
    %p98 = scmp.eq.s32.totalorder %s15, 1
    %p99 = por %p97, %p98
    %p101 = scmp.ne.s32.totalorder %s86, %s100
    %p102 = scmp.eq.s32.totalorder %s15, 0
    %p103 = por %p101, %p102
    %s104 = ssub.s32 %s16, %s28
    %p105 = scmp.eq.s32.totalorder %s104, 0
    %s107 = sadd.s32 %s106, 1
    %s108 = scalar_select %p105, %s106, %s107
    %p111 = pneg %p105
    %p112 = scmp.eq.s32.totalorder %s9, 1
    %p113 = por %p111, %p112
    %p114 = scmp.ne.s32.totalorder %s106, %s109
    %p115 = scmp.eq.s32.totalorder %s9, 0
    %p116 = por %p114, %p115
    %p117 = scmp.ne.s32.totalorder %s106, %s109
    %p118 = scmp.eq.s32.totalorder %s14, 1
    %p119 = por %p117, %p118
    %p120 = scmp.ne.s32.totalorder %s109, %s110
    %p121 = scmp.eq.s32.totalorder %s14, 0
    %p122 = por %p120, %p121
    %p123 = scmp.ne.s32.totalorder %s109, %s110
    %p124 = scmp.eq.s32.totalorder %s15, 1
    %p125 = por %p123, %p124
    %p127 = scmp.ne.s32.totalorder %s110, %s126
    %p128 = scmp.eq.s32.totalorder %s15, 0
    %p129 = por %p127, %p128
    %p130 = scmp.le.s32.totalorder 1, %s9
    %p131 = scmp.lt.s32.totalorder %s9, 3
    %p132 = pnand %p130, %p131
    %p133 = pneg %p132
    // Predicated region
    $region9: #{_lambda_.8} parent=5 // pred_check
      _
    $region10: #{_lambda_.8} parent=5 // pred_check_branch
      %135 = sbr.rel (%p132) target = $region12
    $region11: #{_lambda_.8} parent=5 // pred_region
      %s136 = ssub.s32 %s9, 1
      // Predicated region
      $region13: #{_lambda_.8} parent=11 // pred_check
        %p137 = pneg %p75
      $region14: #{_lambda_.8} parent=11 // pred_check_branch
        %139 = sbr.rel (%p137) target = $region16
      $region15: #{_lambda_.8} parent=11 // pred_region
        %s140 = smul.u32 8, %s19
        %p141 = scmp.lt.s32.totalorder %s140, 7
        %s142 = scalar_select %p141, %s140, 7
        %s143 = smul.addr %s142, 4
        %s144 = scalar_lea.vmem %s1, %s143
        %s145 = smul.u32 8, %s19
      $region16: #{_lambda_.8} parent=11 // pred_fallthru
        _
      // Predicated region
      $region17: #{_lambda_.8} parent=11 // pred_check
        %p146 = pneg %p96
      $region18: #{_lambda_.8} parent=11 // pred_check_branch
        %148 = sbr.rel (%p146) target = $region20
      $region19: #{_lambda_.8} parent=11 // pred_region
        _
      $region20: #{_lambda_.8} parent=11 // pred_fallthru
        _
    $region12: #{_lambda_.8} parent=5 // pred_fallthru
      _
    %p149 = scmp.lt.s32.totalorder %s9, 2
    // Predicated region
    $region21: #{_lambda_.8} parent=5 // pred_check
      %p150 = pneg %p149
    $region22: #{_lambda_.8} parent=5 // pred_check_branch
      %152 = sbr.rel (%p150) target = $region24
    $region23: #{_lambda_.8} parent=5 // pred_region
      // Predicated region
      $region25: #{_lambda_.8} parent=23 // pred_check
        %p153 = pneg %p43
      $region26: #{_lambda_.8} parent=23 // pred_check_branch
        %155 = sbr.rel (%p153) target = $region28
      $region27: #{_lambda_.8} parent=23 // pred_region
        %s156 = smul.u32 8, %s16
        %p157 = scmp.lt.s32.totalorder %s156, 15
        %s158 = scalar_select %p157, %s156, 15
        %p159 = scmp.lt.s32.totalorder %s17, 0
        %s160 = scalar_select %p159, %s17, 0
        %s161 = sadd.s32 %s160, %s158
        %s162 = smul.addr %s161, 4
        %s163 = scalar_lea.vmem %s0, %s162
        %s164 = smul.u32 8, %s16
      $region28: #{_lambda_.8} parent=23 // pred_fallthru
        _
    $region24: #{_lambda_.8} parent=5 // pred_fallthru
      _
    %p165 = scmp.le.s32.totalorder 1, %s9
    %p166 = scmp.lt.s32.totalorder %s9, 3
    %p167 = pnand %p165, %p166
    %p168 = pneg %p167
    // Predicated region
    $region29: #{_lambda_.8} parent=5 // pred_check
      _
    $region30: #{_lambda_.8} parent=5 // pred_check_branch
      %170 = sbr.rel (%p167) target = $region32
    $region31: #{_lambda_.8} parent=5 // pred_region
      %s171 = ssub.s32 %s9, 1
      %s172 = smul.u32 8, %s18
      %p173 = scmp.lt.s32.totalorder %s172, 15
      %s174 = scalar_select %p173, %s172, 15
      %p175 = scmp.lt.s32.totalorder %s19, 0
      %s176 = scalar_select %p175, %s19, 0
      %s177 = sadd.s32 %s176, %s174
      %s178 = smul.addr %s177, 4
      %s179 = scalar_lea.vmem %s0, %s178
      %p180 = pneg %p49
      %p181 = pneg %p46
      %s182 = smul.u32 8, %s19
      %p183 = scmp.lt.s32.totalorder %s182, 7
      %s184 = scalar_select %p183, %s182, 7
      %s185 = smul.addr %s184, 4
      %s186 = scalar_lea.vmem %s1, %s185
      %p187 = pneg %p75
      %p188 = pneg %p72
      %p189 = pneg %p96
      %p190 = pneg %p93
      %p191 = pneg %p122
      %p192 = pneg %p119
      %s193 = smul.u32 8, %s18
      %p194 = scmp.lt.s32.totalorder %s193, 15
      %s195 = scalar_select %p194, %s193, 15
      %s196 = smul.addr %s195, 4
      %s197 = scalar_lea.vmem %s3, %s196
      %s198 = smul.u32 8, %s18
      %p199 = scmp.lt.s32.totalorder %s198, 15
      %s200 = scalar_select %p199, %s198, 15
      %p201 = scmp.lt.s32.totalorder %s19, 0
      %s202 = scalar_select %p201, %s19, 0
      %s203 = sadd.s32 %s202, %s200
      %s204 = smul.addr %s203, 4
      %s205 = scalar_lea.vmem %s0, %s204
      %s206 = smul.u32 8, %s18
      %s207 = smul.u32 8, %s19
      %p208 = scmp.lt.s32.totalorder %s207, 7
      %s209 = scalar_select %p208, %s207, 7
      %s210 = smul.addr %s209, 4
      %s211 = scalar_lea.vmem %s1, %s210
      %s212 = smul.u32 8, %s19
      %s213 = smul.u32 8, %s18
      %p214 = scmp.lt.s32.totalorder %s213, 15
      %s215 = scalar_select %p214, %s213, 15
      %s216 = smul.addr %s215, 4
      %s217 = scalar_lea.vmem %s3, %s216
      %s218 = smul.u32 8, %s18
      %p220 = scmp.eq.s32.totalorder %s19, 0
      // Predicated region
      $region33: #{_lambda_.8} parent=31 // pred_check
        %p221 = pneg %p220
      $region34: #{_lambda_.8} parent=31 // pred_check_branch
        %223 = sbr.rel (%p221) target = $region36
      $region35: #{_lambda_.8} parent=31 // pred_region
        %224 = vst [vmem:[#allocation2] sm:$0xff] 0.0
        %225 = vst [vmem:[#allocation2 + $0x8] sm:$0xff] 0.0
        %226 = vst [vmem:[#allocation2 + $0x10] sm:$0xff] 0.0
        %227 = vst [vmem:[#allocation2 + $0x18] sm:$0xff] 0.0
        %228 = vst [vmem:[#allocation2 + $0x20] sm:$0xff] 0.0
        %229 = vst [vmem:[#allocation2 + $0x28] sm:$0xff] 0.0
        %230 = vst [vmem:[#allocation2 + $0x30] sm:$0xff] 0.0
        %231 = vst [vmem:[#allocation2 + $0x38] sm:$0xff] 0.0
      $region36: #{_lambda_.8} parent=31 // pred_fallthru
        _
      %v232 = vld [vmem:[#allocation2] sm:$0xff]
      %v233 = vld [vmem:[#allocation2 + $0x8] sm:$0xff]
      %v234 = vld [vmem:[#allocation2 + $0x10] sm:$0xff]
      %v235 = vld [vmem:[#allocation2 + $0x18] sm:$0xff]
      %v236 = vld [vmem:[#allocation2 + $0x20] sm:$0xff]
      %v237 = vld [vmem:[#allocation2 + $0x28] sm:$0xff]
      %v238 = vld [vmem:[#allocation2 + $0x30] sm:$0xff]
      %v239 = vld [vmem:[#allocation2 + $0x38] sm:$0xff]
      %v240 = vld [vmem:[%s205] sm:$0xf]
      %v241 = vld [vmem:[%s205 + $0x4] sm:$0xf]
      %v242 = vld [vmem:[%s205 + $0x8] sm:$0xf]
      %v243 = vld [vmem:[%s205 + $0xc] sm:$0xf]
      %v244 = vld [vmem:[%s205 + $0x10] sm:$0xf]
      %v245 = vld [vmem:[%s205 + $0x14] sm:$0xf]
      %v246 = vld [vmem:[%s205 + $0x18] sm:$0xf]
      %v247 = vld [vmem:[%s205 + $0x1c] sm:$0xf]
      %v248 = vld [vmem:[%s211] sm:$0xf]
      %v249 = vld [vmem:[%s211 + $0x4] sm:$0xf]
      %v250 = vld [vmem:[%s211 + $0x8] sm:$0xf]
      %v251 = vld [vmem:[%s211 + $0xc] sm:$0xf]
      %v252 = vld [vmem:[%s211 + $0x10] sm:$0xf]
      %v253 = vld [vmem:[%s211 + $0x14] sm:$0xf]
      %v254 = vld [vmem:[%s211 + $0x18] sm:$0xf]
      %v255 = vld [vmem:[%s211 + $0x1c] sm:$0x3]
      %v264 = vunpack.c.l.b16 %v240
      %v265 = vunpack.c.l.b16 %v241
      %v266 = vunpack.c.l.b16 %v242
      %v267 = vunpack.c.l.b16 %v243
      %v268 = vunpack.c.l.b16 %v244
      %v269 = vunpack.c.l.b16 %v245
      %v270 = vunpack.c.l.b16 %v246
      %v271 = vunpack.c.l.b16 %v247
      %v272 = vpack.c.b16 %v265, %v264
      %v273 = vpack.c.b16 %v267, %v266
      %v274 = vpack.c.b16 %v269, %v268
      %v275 = vpack.c.b16 %v271, %v270
      %v284 = vunpack.c.l.b16 %v248
      %v285 = vunpack.c.l.b16 %v249
      %v286 = vunpack.c.l.b16 %v250
      %v287 = vunpack.c.l.b16 %v251
      %v288 = vunpack.c.l.b16 %v252
      %v289 = vunpack.c.l.b16 %v253
      %v290 = vunpack.c.l.b16 %v254
      %v291 = vunpack.c.l.b16 %v255
      %v292 = vpack.c.b16 %v285, %v284
      %v293 = vpack.c.b16 %v287, %v286
      %v294 = vpack.c.b16 %v289, %v288
      %v295 = vpack.c.b16 %v291, %v290
      %vm299 = vcmask 490496
      %v301 = vsel %vm299, %v272, 0
      %v304 = vsel %vm299, %v273, 0
      %v307 = vsel %vm299, %v274, 0
      %v310 = vsel %vm299, %v275, 0
      %vm312 = vcmask 1045504
      %v314 = vsel %vm312, %v295, 0
      %316 = vmatprep.subr.bf16.mxu0 0
      %317 = vmatpush1.bf16.msra.mxu0 %v292
      %318 = vmatprep.subr.bf16.mxu0 0
      %319 = vmatpush1.bf16.msra.mxu0 %v293
      %320 = vmatprep.subr.bf16.mxu0 0
      %321 = vmatpush1.bf16.msra.mxu0 %v294
      %322 = vmatprep.subr.bf16.mxu0 0
      %323 = vmatpush1.bf16.msra.mxu0 %v314
      %324 = vmatprep.subr.bf16.mxu0 0
      %325 = vmatpush1.bf16.msra.mxu0 0
      %326 = vmatprep.subr.bf16.mxu0 0
      %327 = vmatpush1.bf16.msra.mxu0 0
      %328 = vmatprep.subr.bf16.mxu0 0
      %329 = vmatpush1.bf16.msra.mxu0 0
      %330 = vmatprep.subr.bf16.mxu0 0
      %331 = vmatpush1.bf16.msra.mxu0 0
      %332 = vmatprep.subr.bf16.mxu0 0
      %333 = vmatpush1.bf16.msra.mxu0 0
      %334 = vmatprep.subr.bf16.mxu0 0
      %335 = vmatpush1.bf16.msra.mxu0 0
      %336 = vmatprep.subr.bf16.mxu0 0
      %337 = vmatpush1.bf16.msra.mxu0 0
      %338 = vmatprep.subr.bf16.mxu0 0
      %339 = vmatpush1.bf16.msra.mxu0 0
      %340 = vmatprep.subr.bf16.mxu0 0
      %341 = vmatpush1.bf16.msra.mxu0 0
      %342 = vmatprep.subr.bf16.mxu0 0
      %343 = vmatpush1.bf16.msra.mxu0 0
      %344 = vmatprep.subr.bf16.mxu0 0
      %345 = vmatpush1.bf16.msra.mxu0 0
      %346 = vmatprep.subr.bf16.mxu0 0
      %347 = vmatpush1.bf16.msra.mxu0 0
      %348 = vmatprep.mubr.bf16.mxu0 0
      %349 = vmatmul.mubr.bf16.gmra.mrb[0].mxu0 %v301
      %v350 = vpop.f32.mrb[0].mxu0
      %v351 = vadd.f32 0.0, %v350
      %v352 = vpop.f32.mrb[0].mxu0
      %v353 = vpop.f32.mrb[0].mxu0
      %v354 = vadd.f32 0.0, %v353
      %v355 = vpop.f32.mrb[0].mxu0
      %356 = vmatprep.mubr.bf16.mxu0 0
      %357 = vmatmul.mubr.bf16.gmra.mrb[0].mxu0 %v304
      %v358 = vpop.f32.mrb[0].mxu0
      %v359 = vadd.f32 0.0, %v358
      %v360 = vpop.f32.mrb[0].mxu0
      %v361 = vpop.f32.mrb[0].mxu0
      %v362 = vadd.f32 0.0, %v361
      %v363 = vpop.f32.mrb[0].mxu0
      %364 = vmatprep.mubr.bf16.mxu0 0
      %365 = vmatmul.mubr.bf16.gmra.mrb[0].mxu0 %v307
      %v366 = vpop.f32.mrb[0].mxu0
      %v367 = vadd.f32 0.0, %v366
      %v368 = vpop.f32.mrb[0].mxu0
      %v369 = vpop.f32.mrb[0].mxu0
      %v370 = vadd.f32 0.0, %v369
      %v371 = vpop.f32.mrb[0].mxu0
      %372 = vmatprep.mubr.bf16.mxu0 0
      %373 = vmatmul.mubr.bf16.gmra.mrb[0].mxu0 %v310
      %v374 = vpop.f32.mrb[0].mxu0
      %v375 = vadd.f32 0.0, %v374
      %v376 = vpop.f32.mrb[0].mxu0
      %v377 = vpop.f32.mrb[0].mxu0
      %v378 = vadd.f32 0.0, %v377
      %v379 = vpop.f32.mrb[0].mxu0
      %380 = vdwg.mxu0
      %v381 = vadd.f32 %v232, %v351
      %v382 = vadd.f32 %v233, %v354
      %v383 = vadd.f32 %v234, %v359
      %v384 = vadd.f32 %v235, %v362
      %v385 = vadd.f32 %v236, %v367
      %v386 = vadd.f32 %v237, %v370
      %v387 = vadd.f32 %v238, %v375
      %v388 = vadd.f32 %v239, %v378
      %389 = vst [vmem:[#allocation2] sm:$0xff] %v381
      %390 = vst [vmem:[#allocation2 + $0x8] sm:$0xff] %v382
      %391 = vst [vmem:[#allocation2 + $0x10] sm:$0xff] %v383
      %392 = vst [vmem:[#allocation2 + $0x18] sm:$0xff] %v384
      %393 = vst [vmem:[#allocation2 + $0x20] sm:$0xff] %v385
      %394 = vst [vmem:[#allocation2 + $0x28] sm:$0xff] %v386
      %395 = vst [vmem:[#allocation2 + $0x30] sm:$0xff] %v387
      %396 = vst [vmem:[#allocation2 + $0x38] sm:$0xff] %v388
      // Predicated region
      $region37: #{_lambda_.8} parent=31 // pred_check
        %p397 = pneg %p220
      $region38: #{_lambda_.8} parent=31 // pred_check_branch
        %399 = sbr.rel (%p397) target = $region40
      $region39: #{_lambda_.8} parent=31 // pred_region
        %v400 = vld [vmem:[#allocation2] sm:$0xff]
        %v401 = vld [vmem:[#allocation2 + $0x8] sm:$0xff]
        %v402 = vld [vmem:[#allocation2 + $0x10] sm:$0xff]
        %v403 = vld [vmem:[#allocation2 + $0x18] sm:$0xff]
        %v404 = vld [vmem:[#allocation2 + $0x20] sm:$0xff]
        %v405 = vld [vmem:[#allocation2 + $0x28] sm:$0xff]
        %v406 = vld [vmem:[#allocation2 + $0x30] sm:$0xff]
        %v407 = vld [vmem:[#allocation2 + $0x38] sm:$0xff]
        %v408 = vld [vmem:[%s2] sm:$0x1]
        %v410 = vlaneseq
        %v411 = vshrl.u32 %v410, 7
        %v412 = vsub.s32 0, %v411
        %v413 = vrot.slane %v408, %v412
        %v415 = vadd.f32 %v400, %v413
        %v416 = vadd.f32 %v401, %v413
        %v417 = vadd.f32 %v402, %v413
        %v418 = vadd.f32 %v403, %v413
        %v419 = vadd.f32 %v404, %v413
        %v420 = vadd.f32 %v405, %v413
        %v421 = vadd.f32 %v406, %v413
        %v422 = vadd.f32 %v407, %v413
        %v423 = vpack.c.bf16 %v416, %v415
        %v424 = vpack.c.bf16 %v418, %v417
        %v425 = vpack.c.bf16 %v420, %v419
        %v426 = vpack.c.bf16 %v422, %v421
        %v431 = vunpack.c.l.b16 %v423
        %v432 = vunpack.c.h.b16 %v423
        %v433 = vunpack.c.l.b16 %v424
        %v434 = vunpack.c.h.b16 %v424
        %v435 = vunpack.c.l.b16 %v425
        %v436 = vunpack.c.h.b16 %v425
        %v437 = vunpack.c.l.b16 %v426
        %v438 = vunpack.c.h.b16 %v426
        %v439 = vpack.c.b16 %v431, %v431
        %v440 = vpack.c.b16 %v432, %v432
        %v441 = vpack.c.b16 %v433, %v433
        %v442 = vpack.c.b16 %v434, %v434
        %v443 = vpack.c.b16 %v435, %v435
        %v444 = vpack.c.b16 %v436, %v436
        %v445 = vpack.c.b16 %v437, %v437
        %v446 = vpack.c.b16 %v438, %v438
        %455 = vst [vmem:[%s217] sm:$0xf] %v439
        %456 = vst [vmem:[%s217 + $0x4] sm:$0xf] %v440
        %457 = vst [vmem:[%s217 + $0x8] sm:$0xf] %v441
        %458 = vst [vmem:[%s217 + $0xc] sm:$0xf] %v442
        %459 = vst [vmem:[%s217 + $0x10] sm:$0xf] %v443
        %460 = vst [vmem:[%s217 + $0x14] sm:$0xf] %v444
        %461 = vst [vmem:[%s217 + $0x18] sm:$0xf] %v445
        %462 = vst [vmem:[%s217 + $0x1c] sm:$0xf] %v446
      $region40: #{_lambda_.8} parent=31 // pred_fallthru
        _
      %s463 = smul.u32 8, %s18
      %p464 = scmp.lt.s32.totalorder %s463, 15
      %s465 = scalar_select %p464, %s463, 15
      %s466 = smul.addr %s465, 4
      %s467 = scalar_lea.vmem %s3, %s466
      // Predicated region
      $region41: #{_lambda_.8} parent=31 // pred_check
        %p468 = pneg %p119
      $region42: #{_lambda_.8} parent=31 // pred_check_branch
        %470 = sbr.rel (%p468) target = $region44
      $region43: #{_lambda_.8} parent=31 // pred_region
        %s471 = smul.u32 8, %s18
      $region44: #{_lambda_.8} parent=31 // pred_fallthru
        _
    $region32: #{_lambda_.8} parent=5 // pred_fallthru
      _
    %p472 = scmp.le.s32.totalorder 2, %s9
    // Predicated region
    $region45: #{_lambda_.8} parent=5 // pred_check
      %p473 = pneg %p472
    $region46: #{_lambda_.8} parent=5 // pred_check_branch
      %475 = sbr.rel (%p473) target = $region48
    $region47: #{_lambda_.8} parent=5 // pred_region
      %s476 = ssub.s32 %s9, 2
      // Predicated region
      $region49: #{_lambda_.8} parent=47 // pred_check
        %p477 = pneg %p125
      $region50: #{_lambda_.8} parent=47 // pred_check_branch
        %479 = sbr.rel (%p477) target = $region52
      $region51: #{_lambda_.8} parent=47 // pred_region
        %s480 = smul.u32 8, %s20
        %p481 = scmp.lt.s32.totalorder %s480, 15
        %s482 = scalar_select %p481, %s480, 15
        %s483 = smul.addr %s482, 4
        %s484 = scalar_lea.vmem %s3, %s483
      $region52: #{_lambda_.8} parent=47 // pred_fallthru
        _
    $region48: #{_lambda_.8} parent=5 // pred_fallthru
      _
  $region6: #{_lambda_.8} parent=0 // loop_footer
    %s13 = sadd.s32 1, %s9
  $region7: #{_lambda_.8} parent=0 // loop_footer_branch
    %8 = sbr.rel target = $region3
  $region8: #{_lambda_.8} parent=0 // loop_exit
    _

// kernel: _lambda_.9
$region0: #{_lambda_.9}
  #allocation0 [shape = 'u32[]', space=smem, size = 0x4, offset = 0x4, fixed_abs, tag = 'smem constant byte address 0x4 - core index']
  #allocation1 [shape = 'u32[144,128]{1,0:T(1,128)}', space=vmem, size = 0x12000, scoped, tag = 'internal scratch']
  #allocation2 [shape = 'f32[14,128]{1,0:T(8,128)}', space=vmem, size = 0x2000, scoped, tag = 'scratch operand']
  %s0 = inlined_call_operand.vmem [shape: bf16[14,540], index: 0, kind: input, shape index: {}]
  %s1 = inlined_call_operand.vmem [shape: bf16[540,128], index: 1, kind: input, shape index: {}]
  %s2 = inlined_call_operand.vmem [shape: f32[1,128], index: 2, kind: input, shape index: {}]
  %s3 = inlined_call_operand.vmem [shape: bf16[14,128], index: 3, kind: output, shape index: {}]
  %s4 = sld [smem:[#allocation0]]
  $region30: #{_lambda_.9} parent=0
    _
  %s6 = ssub.s32 1, %s4
  %s7 = scalar_select 0, %s6, %s4
  // Predicated region
  $region2: #{_lambda_.9} parent=0 // pred_check
    _
  $region3: #{_lambda_.9} parent=0 // pred_check_branch
    %9 = sbr.rel (0) target = $region5
  $region4: #{_lambda_.9} parent=0 // pred_region
    _
  $region5: #{_lambda_.9} parent=0 // pred_fallthru
    _
  // Predicated region
  $region6: #{_lambda_.9} parent=0 // pred_check
    _
  $region7: #{_lambda_.9} parent=0 // pred_check_branch
    %11 = sbr.rel (0) target = $region9
  $region8: #{_lambda_.9} parent=0 // pred_region
    _
  $region9: #{_lambda_.9} parent=0 // pred_fallthru
    _
  // Predicated region
  $region10: #{_lambda_.9} parent=0 // pred_check
    _
  $region11: #{_lambda_.9} parent=0 // pred_check_branch
    %13 = sbr.rel (0) target = $region13
  $region12: #{_lambda_.9} parent=0 // pred_region
    _
  $region13: #{_lambda_.9} parent=0 // pred_fallthru
    _
  %p15 = scmp.eq.s32.totalorder 0, 0
  // Predicated region
  $region14: #{_lambda_.9} parent=0 // pred_check
    %p16 = pneg %p15
  $region15: #{_lambda_.9} parent=0 // pred_check_branch
    %18 = sbr.rel (%p16) target = $region17
  $region16: #{_lambda_.9} parent=0 // pred_region
    %19 = vst [vmem:[#allocation2] sm:$0xff] 0.0
    %20 = vst [vmem:[#allocation2 + $0x8] sm:$0x3f] 0.0
  $region17: #{_lambda_.9} parent=0 // pred_fallthru
    _
  %v21 = vld [vmem:[#allocation2] sm:$0xff]
  %v22 = vld [vmem:[#allocation2 + $0x8] sm:$0x3f]
  %v23 = vld [vmem:[%s0] sm:$0xff]
  %v24 = vld [vmem:[%s0 + $0x8] sm:$0xff]
  %v25 = vld [vmem:[%s0 + $0x10] sm:$0xf]
  %v26 = vld [vmem:[%s0 + $0x14] sm:$0x77]
  %v27 = vld [vmem:[%s0 + $0x1c] sm:$0x77]
  %v28 = vld [vmem:[%s0 + $0x24] sm:$0x7]
  %v29 = vld [vmem:[%s1] sm:$0xf]
  %v30 = vld [vmem:[%s1 + $0x4] sm:$0xf]
  %v31 = vld [vmem:[%s1 + $0x8] sm:$0xf]
  %v32 = vld [vmem:[%s1 + $0xc] sm:$0xf]
  %v33 = vld [vmem:[%s1 + $0x10] sm:$0xf]
  %v34 = vld [vmem:[%s1 + $0x14] sm:$0xf]
  %v35 = vld [vmem:[%s1 + $0x18] sm:$0xf]
  %v36 = vld [vmem:[%s1 + $0x1c] sm:$0xf]
  %v37 = vld [vmem:[%s1 + $0x20] sm:$0xf]
  %v38 = vld [vmem:[%s1 + $0x24] sm:$0xf]
  %v39 = vld [vmem:[%s1 + $0x28] sm:$0xf]
  %v40 = vld [vmem:[%s1 + $0x2c] sm:$0xf]
  %v41 = vld [vmem:[%s1 + $0x30] sm:$0xf]
  %v42 = vld [vmem:[%s1 + $0x34] sm:$0xf]
  %v43 = vld [vmem:[%s1 + $0x38] sm:$0xf]
  %v44 = vld [vmem:[%s1 + $0x3c] sm:$0xf]
  %v45 = vld [vmem:[%s1 + $0x40] sm:$0xf]
  %v46 = vld [vmem:[%s1 + $0x44] sm:$0xf]
  %v47 = vld [vmem:[%s1 + $0x48] sm:$0xf]
  %v48 = vld [vmem:[%s1 + $0x4c] sm:$0xf]
  %v49 = vld [vmem:[%s1 + $0x50] sm:$0xf]
  %v50 = vld [vmem:[%s1 + $0x54] sm:$0xf]
  %v51 = vld [vmem:[%s1 + $0x58] sm:$0xf]
  %v52 = vld [vmem:[%s1 + $0x5c] sm:$0xf]
  %v53 = vld [vmem:[%s1 + $0x60] sm:$0xf]
  %v54 = vld [vmem:[%s1 + $0x64] sm:$0xf]
  %v55 = vld [vmem:[%s1 + $0x68] sm:$0xf]
  %v56 = vld [vmem:[%s1 + $0x6c] sm:$0xf]
  %v57 = vld [vmem:[%s1 + $0x70] sm:$0xf]
  %v58 = vld [vmem:[%s1 + $0x74] sm:$0xf]
  %v59 = vld [vmem:[%s1 + $0x78] sm:$0xf]
  %v60 = vld [vmem:[%s1 + $0x7c] sm:$0xf]
  %v61 = vld [vmem:[%s1 + $0x80] sm:$0xf]
  %v62 = vld [vmem:[%s1 + $0x84] sm:$0xf]
  %v63 = vld [vmem:[%s1 + $0x88] sm:$0xf]
  %v64 = vld [vmem:[%s1 + $0x8c] sm:$0xf]
  %v65 = vld [vmem:[%s1 + $0x90] sm:$0xf]
  %v66 = vld [vmem:[%s1 + $0x94] sm:$0xf]
  %v67 = vld [vmem:[%s1 + $0x98] sm:$0xf]
  %v68 = vld [vmem:[%s1 + $0x9c] sm:$0xf]
  %v69 = vld [vmem:[%s1 + $0xa0] sm:$0xf]
  %v70 = vld [vmem:[%s1 + $0xa4] sm:$0xf]
  %v71 = vld [vmem:[%s1 + $0xa8] sm:$0xf]
  %v72 = vld [vmem:[%s1 + $0xac] sm:$0xf]
  %v73 = vld [vmem:[%s1 + $0xb0] sm:$0xf]
  %v74 = vld [vmem:[%s1 + $0xb4] sm:$0xf]
  %v75 = vld [vmem:[%s1 + $0xb8] sm:$0xf]
  %v76 = vld [vmem:[%s1 + $0xbc] sm:$0xf]
  %v77 = vld [vmem:[%s1 + $0xc0] sm:$0xf]
  %v78 = vld [vmem:[%s1 + $0xc4] sm:$0xf]
  %v79 = vld [vmem:[%s1 + $0xc8] sm:$0xf]
  %v80 = vld [vmem:[%s1 + $0xcc] sm:$0xf]
  %v81 = vld [vmem:[%s1 + $0xd0] sm:$0xf]
  %v82 = vld [vmem:[%s1 + $0xd4] sm:$0xf]
  %v83 = vld [vmem:[%s1 + $0xd8] sm:$0xf]
  %v84 = vld [vmem:[%s1 + $0xdc] sm:$0xf]
  %v85 = vld [vmem:[%s1 + $0xe0] sm:$0xf]
  %v86 = vld [vmem:[%s1 + $0xe4] sm:$0xf]
  %v87 = vld [vmem:[%s1 + $0xe8] sm:$0xf]
  %v88 = vld [vmem:[%s1 + $0xec] sm:$0xf]
  %v89 = vld [vmem:[%s1 + $0xf0] sm:$0xf]
  %v90 = vld [vmem:[%s1 + $0xf4] sm:$0xf]
  %v91 = vld [vmem:[%s1 + $0xf8] sm:$0xf]
  %v92 = vld [vmem:[%s1 + $0xfc] sm:$0xf]
  %v93 = vld [vmem:[%s1 + $0x100] sm:$0xf]
  %v94 = vld [vmem:[%s1 + $0x104] sm:$0xf]
  %v95 = vld [vmem:[%s1 + $0x108] sm:$0xf]
  %v96 = vld [vmem:[%s1 + $0x10c] sm:$0x3]
  %v103 = vunpack.c.l.b16 %v23
  %v104 = vunpack.c.h.b16 %v23
  %v105 = vunpack.c.l.b16 %v24
  %v106 = vunpack.c.h.b16 %v24
  %v107 = vunpack.c.l.b16 %v25
  %v108 = vunpack.c.l.b16 %v26
  %v109 = vunpack.c.h.b16 %v26
  %v110 = vunpack.c.l.b16 %v27
  %v111 = vunpack.c.h.b16 %v27
  %v112 = vunpack.c.l.b16 %v28
  %v113 = vpack.c.b16 %v108, %v103
  %v114 = vpack.c.b16 %v109, %v104
  %v115 = vpack.c.b16 %v110, %v105
  %v116 = vpack.c.b16 %v111, %v106
  %v117 = vpack.c.b16 %v112, %v107
  %v190 = vunpack.c.l.b16 %v29
  %v191 = vunpack.c.l.b16 %v30
  %v192 = vunpack.c.l.b16 %v31
  %v193 = vunpack.c.l.b16 %v32
  %v194 = vunpack.c.l.b16 %v33
  %v195 = vunpack.c.l.b16 %v34
  %v196 = vunpack.c.l.b16 %v35
  %v197 = vunpack.c.l.b16 %v36
  %v198 = vunpack.c.l.b16 %v37
  %v199 = vunpack.c.l.b16 %v38
  %v200 = vunpack.c.l.b16 %v39
  %v201 = vunpack.c.l.b16 %v40
  %v202 = vunpack.c.l.b16 %v41
  %v203 = vunpack.c.l.b16 %v42
  %v204 = vunpack.c.l.b16 %v43
  %v205 = vunpack.c.l.b16 %v44
  %v206 = vunpack.c.l.b16 %v45
  %v207 = vunpack.c.l.b16 %v46
  %v208 = vunpack.c.l.b16 %v47
  %v209 = vunpack.c.l.b16 %v48
  %v210 = vunpack.c.l.b16 %v49
  %v211 = vunpack.c.l.b16 %v50
  %v212 = vunpack.c.l.b16 %v51
  %v213 = vunpack.c.l.b16 %v52
  %v214 = vunpack.c.l.b16 %v53
  %v215 = vunpack.c.l.b16 %v54
  %v216 = vunpack.c.l.b16 %v55
  %v217 = vunpack.c.l.b16 %v56
  %v218 = vunpack.c.l.b16 %v57
  %v219 = vunpack.c.l.b16 %v58
  %v220 = vunpack.c.l.b16 %v59
  %v221 = vunpack.c.l.b16 %v60
  %v222 = vunpack.c.l.b16 %v61
  %v223 = vunpack.c.l.b16 %v62
  %v224 = vunpack.c.l.b16 %v63
  %v225 = vunpack.c.l.b16 %v64
  %v226 = vunpack.c.l.b16 %v65
  %v227 = vunpack.c.l.b16 %v66
  %v228 = vunpack.c.l.b16 %v67
  %v229 = vunpack.c.l.b16 %v68
  %v230 = vunpack.c.l.b16 %v69
  %v231 = vunpack.c.l.b16 %v70
  %v232 = vunpack.c.l.b16 %v71
  %v233 = vunpack.c.l.b16 %v72
  %v234 = vunpack.c.l.b16 %v73
  %v235 = vunpack.c.l.b16 %v74
  %v236 = vunpack.c.l.b16 %v75
  %v237 = vunpack.c.l.b16 %v76
  %v238 = vunpack.c.l.b16 %v77
  %v239 = vunpack.c.l.b16 %v78
  %v240 = vunpack.c.l.b16 %v79
  %v241 = vunpack.c.l.b16 %v80
  %v242 = vunpack.c.l.b16 %v81
  %v243 = vunpack.c.l.b16 %v82
  %v244 = vunpack.c.l.b16 %v83
  %v245 = vunpack.c.l.b16 %v84
  %v246 = vunpack.c.l.b16 %v85
  %v247 = vunpack.c.l.b16 %v86
  %v248 = vunpack.c.l.b16 %v87
  %v249 = vunpack.c.l.b16 %v88
  %v250 = vunpack.c.l.b16 %v89
  %v251 = vunpack.c.l.b16 %v90
  %v252 = vunpack.c.l.b16 %v91
  %v253 = vunpack.c.l.b16 %v92
  %v254 = vunpack.c.l.b16 %v93
  %v255 = vunpack.c.l.b16 %v94
  %v256 = vunpack.c.l.b16 %v95
  %v257 = vunpack.c.l.b16 %v96
  %v258 = vpack.c.b16 %v191, %v190
  %v259 = vpack.c.b16 %v193, %v192
  %v260 = vpack.c.b16 %v195, %v194
  %v261 = vpack.c.b16 %v197, %v196
  %v262 = vpack.c.b16 %v199, %v198
  %v263 = vpack.c.b16 %v201, %v200
  %v264 = vpack.c.b16 %v203, %v202
  %v265 = vpack.c.b16 %v205, %v204
  %v266 = vpack.c.b16 %v207, %v206
  %v267 = vpack.c.b16 %v209, %v208
  %v268 = vpack.c.b16 %v211, %v210
  %v269 = vpack.c.b16 %v213, %v212
  %v270 = vpack.c.b16 %v215, %v214
  %v271 = vpack.c.b16 %v217, %v216
  %v272 = vpack.c.b16 %v219, %v218
  %v273 = vpack.c.b16 %v221, %v220
  %v274 = vpack.c.b16 %v223, %v222
  %v275 = vpack.c.b16 %v225, %v224
  %v276 = vpack.c.b16 %v227, %v226
  %v277 = vpack.c.b16 %v229, %v228
  %v278 = vpack.c.b16 %v231, %v230
  %v279 = vpack.c.b16 %v233, %v232
  %v280 = vpack.c.b16 %v235, %v234
  %v281 = vpack.c.b16 %v237, %v236
  %v282 = vpack.c.b16 %v239, %v238
  %v283 = vpack.c.b16 %v241, %v240
  %v284 = vpack.c.b16 %v243, %v242
  %v285 = vpack.c.b16 %v245, %v244
  %v286 = vpack.c.b16 %v247, %v246
  %v287 = vpack.c.b16 %v249, %v248
  %v288 = vpack.c.b16 %v251, %v250
  %v289 = vpack.c.b16 %v253, %v252
  %v290 = vpack.c.b16 %v255, %v254
  %v291 = vpack.c.b16 %v257, %v256
  %vm325 = vcmask 228352
  %v327 = vsel %vm325, %v117, 0
  %vm329 = vcmask 1045504
  %v331 = vsel %vm329, %v291, 0
  %333 = vmatprep.subr.bf16.mxu0 0
  %334 = vmatpush1.bf16.msra.mxu0 %v258
  %335 = vmatprep.subr.bf16.mxu0 0
  %336 = vmatpush1.bf16.msra.mxu0 %v259
  %337 = vmatprep.subr.bf16.mxu0 0
  %338 = vmatpush1.bf16.msra.mxu0 %v260
  %339 = vmatprep.subr.bf16.mxu0 0
  %340 = vmatpush1.bf16.msra.mxu0 %v261
  %341 = vmatprep.subr.bf16.mxu0 0
  %342 = vmatpush1.bf16.msra.mxu0 %v262
  %343 = vmatprep.subr.bf16.mxu0 0
  %344 = vmatpush1.bf16.msra.mxu0 %v263
  %345 = vmatprep.subr.bf16.mxu0 0
  %346 = vmatpush1.bf16.msra.mxu0 %v264
  %347 = vmatprep.subr.bf16.mxu0 0
  %348 = vmatpush1.bf16.msra.mxu0 %v265
  %349 = vmatprep.subr.bf16.mxu0 0
  %350 = vmatpush1.bf16.msra.mxu0 %v266
  %351 = vmatprep.subr.bf16.mxu0 0
  %352 = vmatpush1.bf16.msra.mxu0 %v267
  %353 = vmatprep.subr.bf16.mxu0 0
  %354 = vmatpush1.bf16.msra.mxu0 %v268
  %355 = vmatprep.subr.bf16.mxu0 0
  %356 = vmatpush1.bf16.msra.mxu0 %v269
  %357 = vmatprep.subr.bf16.mxu0 0
  %358 = vmatpush1.bf16.msra.mxu0 %v270
  %359 = vmatprep.subr.bf16.mxu0 0
  %360 = vmatpush1.bf16.msra.mxu0 %v271
  %361 = vmatprep.subr.bf16.mxu0 0
  %362 = vmatpush1.bf16.msra.mxu0 %v272
  %363 = vmatprep.subr.bf16.mxu0 0
  %364 = vmatpush1.bf16.msra.mxu0 %v273
  %365 = vmatprep.mubr.bf16.mxu0 %v114
  %366 = vmatmul.mubr.bf16.gmra.mrb[0].mxu0 %v113
  %v367 = vpop.f32.mrb[0].mxu0
  %v368 = vadd.f32 0.0, %v367
  %v369 = vpop.f32.mrb[0].mxu0
  %v370 = vpop.f32.mrb[0].mxu0
  %v371 = vadd.f32 0.0, %v370
  %v372 = vpop.f32.mrb[0].mxu0
  %373 = vdwg.mxu0
  %374 = vmatprep.subr.bf16.mxu0 0
  %375 = vmatpush1.bf16.msra.mxu0 %v274
  %376 = vmatprep.subr.bf16.mxu0 0
  %377 = vmatpush1.bf16.msra.mxu0 %v275
  %378 = vmatprep.subr.bf16.mxu0 0
  %379 = vmatpush1.bf16.msra.mxu0 %v276
  %380 = vmatprep.subr.bf16.mxu0 0
  %381 = vmatpush1.bf16.msra.mxu0 %v277
  %382 = vmatprep.subr.bf16.mxu0 0
  %383 = vmatpush1.bf16.msra.mxu0 %v278
  %384 = vmatprep.subr.bf16.mxu0 0
  %385 = vmatpush1.bf16.msra.mxu0 %v279
  %386 = vmatprep.subr.bf16.mxu0 0
  %387 = vmatpush1.bf16.msra.mxu0 %v280
  %388 = vmatprep.subr.bf16.mxu0 0
  %389 = vmatpush1.bf16.msra.mxu0 %v281
  %390 = vmatprep.subr.bf16.mxu0 0
  %391 = vmatpush1.bf16.msra.mxu0 %v282
  %392 = vmatprep.subr.bf16.mxu0 0
  %393 = vmatpush1.bf16.msra.mxu0 %v283
  %394 = vmatprep.subr.bf16.mxu0 0
  %395 = vmatpush1.bf16.msra.mxu0 %v284
  %396 = vmatprep.subr.bf16.mxu0 0
  %397 = vmatpush1.bf16.msra.mxu0 %v285
  %398 = vmatprep.subr.bf16.mxu0 0
  %399 = vmatpush1.bf16.msra.mxu0 %v286
  %400 = vmatprep.subr.bf16.mxu0 0
  %401 = vmatpush1.bf16.msra.mxu0 %v287
  %402 = vmatprep.subr.bf16.mxu0 0
  %403 = vmatpush1.bf16.msra.mxu0 %v288
  %404 = vmatprep.subr.bf16.mxu0 0
  %405 = vmatpush1.bf16.msra.mxu0 %v289
  %406 = vmatprep.mubr.bf16.mxu0 %v116
  %407 = vmatmul.mubr.bf16.gmra.mrb[0].mxu0 %v115
  %v408 = vpop.f32.mrb[0].mxu0
  %v409 = vadd.f32 %v368, %v408
  %v410 = vpop.f32.mrb[0].mxu0
  %v411 = vpop.f32.mrb[0].mxu0
  %v412 = vadd.f32 %v371, %v411
  %v413 = vpop.f32.mrb[0].mxu0
  %414 = vdwg.mxu0
  %415 = vmatprep.subr.bf16.mxu0 0
  %416 = vmatpush1.bf16.msra.mxu0 %v290
  %417 = vmatprep.subr.bf16.mxu0 0
  %418 = vmatpush1.bf16.msra.mxu0 %v331
  %419 = vmatprep.subr.bf16.mxu0 0
  %420 = vmatpush1.bf16.msra.mxu0 0
  %421 = vmatprep.subr.bf16.mxu0 0
  %422 = vmatpush1.bf16.msra.mxu0 0
  %423 = vmatprep.subr.bf16.mxu0 0
  %424 = vmatpush1.bf16.msra.mxu0 0
  %425 = vmatprep.subr.bf16.mxu0 0
  %426 = vmatpush1.bf16.msra.mxu0 0
  %427 = vmatprep.subr.bf16.mxu0 0
  %428 = vmatpush1.bf16.msra.mxu0 0
  %429 = vmatprep.subr.bf16.mxu0 0
  %430 = vmatpush1.bf16.msra.mxu0 0
  %431 = vmatprep.subr.bf16.mxu0 0
  %432 = vmatpush1.bf16.msra.mxu0 0
  %433 = vmatprep.subr.bf16.mxu0 0
  %434 = vmatpush1.bf16.msra.mxu0 0
  %435 = vmatprep.subr.bf16.mxu0 0
  %436 = vmatpush1.bf16.msra.mxu0 0
  %437 = vmatprep.subr.bf16.mxu0 0
  %438 = vmatpush1.bf16.msra.mxu0 0
  %439 = vmatprep.subr.bf16.mxu0 0
  %440 = vmatpush1.bf16.msra.mxu0 0
  %441 = vmatprep.subr.bf16.mxu0 0
  %442 = vmatpush1.bf16.msra.mxu0 0
  %443 = vmatprep.subr.bf16.mxu0 0
  %444 = vmatpush1.bf16.msra.mxu0 0
  %445 = vmatprep.subr.bf16.mxu0 0
  %446 = vmatpush1.bf16.msra.mxu0 0
  %447 = vmatprep.mubr.bf16.mxu0 0
  %448 = vmatmul.mubr.bf16.gmra.mrb[0].mxu0 %v327
  %v449 = vpop.f32.mrb[0].mxu0
  %v450 = vadd.f32 %v409, %v449
  %v451 = vpop.f32.mrb[0].mxu0
  %v452 = vpop.f32.mrb[0].mxu0
  %v453 = vadd.f32 %v412, %v452
  %v454 = vpop.f32.mrb[0].mxu0
  %455 = vdwg.mxu0
  %v456 = vadd.f32 %v21, %v450
  %v457 = vadd.f32 %v22, %v453
  %458 = vst [vmem:[#allocation2] sm:$0xff] %v456
  %459 = vst [vmem:[#allocation2 + $0x8] sm:$0x3f] %v457
  // Predicated region
  $region18: #{_lambda_.9} parent=0 // pred_check
    %p460 = pneg %p15
  $region19: #{_lambda_.9} parent=0 // pred_check_branch
    %462 = sbr.rel (%p460) target = $region21
  $region20: #{_lambda_.9} parent=0 // pred_region
    %v463 = vld [vmem:[#allocation2] sm:$0xff]
    %v464 = vld [vmem:[#allocation2 + $0x8] sm:$0x3f]
    %v465 = vld [vmem:[%s2] sm:$0x1]
    %v467 = vlaneseq
    %v468 = vshrl.u32 %v467, 7
    %v469 = vsub.s32 0, %v468
    %v470 = vrot.slane %v465, %v469
    %v472 = vadd.f32 %v463, %v470
    %v473 = vadd.f32 %v464, %v470
    %v474 = vmax.f32 %v472, 0.0
    %v475 = vmax.f32 %v473, 0.0
    %v476 = vpack.c.bf16 %v475, %v474
    %v478 = vunpack.c.l.b16 %v476
    %v479 = vunpack.c.h.b16 %v476
    %v480 = vpack.c.b16 %v478, %v478
    %v481 = vpack.c.b16 %v479, %v479
    %484 = vst [vmem:[%s3] sm:$0xf] %v480
    %485 = vst [vmem:[%s3 + $0x4] sm:$0x7] %v481
  $region21: #{_lambda_.9} parent=0 // pred_fallthru
    _
  // Predicated region
  $region22: #{_lambda_.9} parent=0 // pred_check
    _
  $region23: #{_lambda_.9} parent=0 // pred_check_branch
    %487 = sbr.rel (0) target = $region25
  $region24: #{_lambda_.9} parent=0 // pred_region
    _
  $region25: #{_lambda_.9} parent=0 // pred_fallthru
    _
  // Predicated region
  $region26: #{_lambda_.9} parent=0 // pred_check
    _
  $region27: #{_lambda_.9} parent=0 // pred_check_branch
    %489 = sbr.rel (0) target = $region29
  $region28: #{_lambda_.9} parent=0 // pred_region
    _
  $region29: #{_lambda_.9} parent=0 // pred_fallthru
    _

// kernel: _lambda_.11
$region0: #{_lambda_.11}
  #allocation0 [shape = 'u32[]', space=smem, size = 0x4, offset = 0x4, fixed_abs, tag = 'smem constant byte address 0x4 - core index']
  #allocation1 [shape = 'u32[144,128]{1,0:T(1,128)}', space=vmem, size = 0x12000, scoped, tag = 'internal scratch']
  #allocation2 [shape = 'f32[8,128]{1,0:T(8,128)}', space=vmem, size = 0x1000, scoped, tag = 'scratch operand']
  %s0 = inlined_call_operand.vmem [shape: bf16[8,105], index: 0, kind: input, shape index: {}]
  %s1 = inlined_call_operand.vmem [shape: bf16[105,128], index: 1, kind: input, shape index: {}]
  %s2 = inlined_call_operand.vmem [shape: f32[1,128], index: 2, kind: input, shape index: {}]
  %s3 = inlined_call_operand.vmem [shape: bf16[8,128], index: 3, kind: output, shape index: {}]
  %s4 = sld [smem:[#allocation0]]
  $region30: #{_lambda_.11} parent=0
    _
  %s6 = ssub.s32 1, %s4
  %s7 = scalar_select 0, %s6, %s4
  // Predicated region
  $region2: #{_lambda_.11} parent=0 // pred_check
    _
  $region3: #{_lambda_.11} parent=0 // pred_check_branch
    %9 = sbr.rel (0) target = $region5
  $region4: #{_lambda_.11} parent=0 // pred_region
    _
  $region5: #{_lambda_.11} parent=0 // pred_fallthru
    _
  // Predicated region
  $region6: #{_lambda_.11} parent=0 // pred_check
    _
  $region7: #{_lambda_.11} parent=0 // pred_check_branch
    %11 = sbr.rel (0) target = $region9
  $region8: #{_lambda_.11} parent=0 // pred_region
    _
  $region9: #{_lambda_.11} parent=0 // pred_fallthru
    _
  // Predicated region
  $region10: #{_lambda_.11} parent=0 // pred_check
    _
  $region11: #{_lambda_.11} parent=0 // pred_check_branch
    %13 = sbr.rel (0) target = $region13
  $region12: #{_lambda_.11} parent=0 // pred_region
    _
  $region13: #{_lambda_.11} parent=0 // pred_fallthru
    _
  %p15 = scmp.eq.s32.totalorder 0, 0
  // Predicated region
  $region14: #{_lambda_.11} parent=0 // pred_check
    %p16 = pneg %p15
  $region15: #{_lambda_.11} parent=0 // pred_check_branch
    %18 = sbr.rel (%p16) target = $region17
  $region16: #{_lambda_.11} parent=0 // pred_region
    %19 = vst [vmem:[#allocation2] sm:$0xff] 0.0
  $region17: #{_lambda_.11} parent=0 // pred_fallthru
    _
  %v20 = vld [vmem:[#allocation2] sm:$0xff]
  %v21 = vld [vmem:[%s0] sm:$0xf]
  %v22 = vld [vmem:[%s1] sm:$0xf]
  %v23 = vld [vmem:[%s1 + $0x4] sm:$0xf]
  %v24 = vld [vmem:[%s1 + $0x8] sm:$0xf]
  %v25 = vld [vmem:[%s1 + $0xc] sm:$0xf]
  %v26 = vld [vmem:[%s1 + $0x10] sm:$0xf]
  %v27 = vld [vmem:[%s1 + $0x14] sm:$0xf]
  %v28 = vld [vmem:[%s1 + $0x18] sm:$0xf]
  %v29 = vld [vmem:[%s1 + $0x1c] sm:$0xf]
  %v30 = vld [vmem:[%s1 + $0x20] sm:$0xf]
  %v31 = vld [vmem:[%s1 + $0x24] sm:$0xf]
  %v32 = vld [vmem:[%s1 + $0x28] sm:$0xf]
  %v33 = vld [vmem:[%s1 + $0x2c] sm:$0xf]
  %v34 = vld [vmem:[%s1 + $0x30] sm:$0xf]
  %v35 = vld [vmem:[%s1 + $0x34] sm:$0x1]
  %v50 = vunpack.c.l.b16 %v22
  %v51 = vunpack.c.l.b16 %v23
  %v52 = vunpack.c.l.b16 %v24
  %v53 = vunpack.c.l.b16 %v25
  %v54 = vunpack.c.l.b16 %v26
  %v55 = vunpack.c.l.b16 %v27
  %v56 = vunpack.c.l.b16 %v28
  %v57 = vunpack.c.l.b16 %v29
  %v58 = vunpack.c.l.b16 %v30
  %v59 = vunpack.c.l.b16 %v31
  %v60 = vunpack.c.l.b16 %v32
  %v61 = vunpack.c.l.b16 %v33
  %v62 = vunpack.c.l.b16 %v34
  %v63 = vunpack.c.l.b16 %v35
  %v64 = vpack.c.b16 %v51, %v50
  %v65 = vpack.c.b16 %v53, %v52
  %v66 = vpack.c.b16 %v55, %v54
  %v67 = vpack.c.b16 %v57, %v56
  %v68 = vpack.c.b16 %v59, %v58
  %v69 = vpack.c.b16 %v61, %v60
  %v70 = vpack.c.b16 %v63, %v62
  %vm77 = vcmask 859136
  %v79 = vsel %vm77, %v21, 0
  %vm81 = vcmask 1043456
  %vm82 = vcmask 1044480
  %v83 = vsel %vm81, 4294967295, 65535
  %v84 = vsel %vm82, %v83, 0
  %v86 = vand.u32 %v70, %v84
  %88 = vmatprep.subr.bf16.mxu0 0
  %89 = vmatpush1.bf16.msra.mxu0 %v64
  %90 = vmatprep.subr.bf16.mxu0 0
  %91 = vmatpush1.bf16.msra.mxu0 %v65
  %92 = vmatprep.subr.bf16.mxu0 0
  %93 = vmatpush1.bf16.msra.mxu0 %v66
  %94 = vmatprep.subr.bf16.mxu0 0
  %95 = vmatpush1.bf16.msra.mxu0 %v67
  %96 = vmatprep.subr.bf16.mxu0 0
  %97 = vmatpush1.bf16.msra.mxu0 %v68
  %98 = vmatprep.subr.bf16.mxu0 0
  %99 = vmatpush1.bf16.msra.mxu0 %v69
  %100 = vmatprep.subr.bf16.mxu0 0
  %101 = vmatpush1.bf16.msra.mxu0 %v86
  %102 = vmatprep.subr.bf16.mxu0 0
  %103 = vmatpush1.bf16.msra.mxu0 0
  %104 = vmatprep.subr.bf16.mxu0 0
  %105 = vmatpush1.bf16.msra.mxu0 0
  %106 = vmatprep.subr.bf16.mxu0 0
  %107 = vmatpush1.bf16.msra.mxu0 0
  %108 = vmatprep.subr.bf16.mxu0 0
  %109 = vmatpush1.bf16.msra.mxu0 0
  %110 = vmatprep.subr.bf16.mxu0 0
  %111 = vmatpush1.bf16.msra.mxu0 0
  %112 = vmatprep.subr.bf16.mxu0 0
  %113 = vmatpush1.bf16.msra.mxu0 0
  %114 = vmatprep.subr.bf16.mxu0 0
  %115 = vmatpush1.bf16.msra.mxu0 0
  %116 = vmatprep.subr.bf16.mxu0 0
  %117 = vmatpush1.bf16.msra.mxu0 0
  %118 = vmatprep.subr.bf16.mxu0 0
  %119 = vmatpush1.bf16.msra.mxu0 0
  %120 = vmatprep.mubr.bf16.mxu0 0
  %121 = vmatmul.mubr.bf16.gmra.mrb[0].mxu0 %v79
  %v122 = vpop.f32.mrb[0].mxu0
  %v123 = vadd.f32 0.0, %v122
  %v124 = vpop.f32.mrb[0].mxu0
  %v125 = vpop.f32.mrb[0].mxu0
  %v126 = vpop.f32.mrb[0].mxu0
  %127 = vdwg.mxu0
  %v128 = vadd.f32 %v20, %v123
  %129 = vst [vmem:[#allocation2] sm:$0xff] %v128
  // Predicated region
  $region18: #{_lambda_.11} parent=0 // pred_check
    %p130 = pneg %p15
  $region19: #{_lambda_.11} parent=0 // pred_check_branch
    %132 = sbr.rel (%p130) target = $region21
  $region20: #{_lambda_.11} parent=0 // pred_region
    %v133 = vld [vmem:[#allocation2] sm:$0xff]
    %v134 = vld [vmem:[%s2] sm:$0x1]
    %v136 = vlaneseq
    %v137 = vshrl.u32 %v136, 7
    %v138 = vsub.s32 0, %v137
    %v139 = vrot.slane %v134, %v138
    %v141 = vadd.f32 %v133, %v139
    %v142 = vmax.f32 %v141, 0.0
    %v143 = vpack.c.bf16 %v142, %v142
    %144 = vst [vmem:[%s3] sm:$0xf] %v143
  $region21: #{_lambda_.11} parent=0 // pred_fallthru
    _
  // Predicated region
  $region22: #{_lambda_.11} parent=0 // pred_check
    _
  $region23: #{_lambda_.11} parent=0 // pred_check_branch
    %146 = sbr.rel (0) target = $region25
  $region24: #{_lambda_.11} parent=0 // pred_region
    _
  $region25: #{_lambda_.11} parent=0 // pred_fallthru
    _
  // Predicated region
  $region26: #{_lambda_.11} parent=0 // pred_check
    _
  $region27: #{_lambda_.11} parent=0 // pred_check_branch
    %148 = sbr.rel (0) target = $region29
  $region28: #{_lambda_.11} parent=0 // pred_region
    _
  $region29: #{_lambda_.11} parent=0 // pred_fallthru
    _

// kernel: _lambda_.10
$region0: #{_lambda_.10}
  #allocation0 [shape = 'u32[]', space=smem, size = 0x4, offset = 0x4, fixed_abs, tag = 'smem constant byte address 0x4 - core index']
  #allocation1 [shape = 'u32[144,128]{1,0:T(1,128)}', space=vmem, size = 0x12000, scoped, tag = 'internal scratch']
  #allocation2 [shape = 'f32[8,128]{1,0:T(8,128)}', space=vmem, size = 0x1000, scoped, tag = 'scratch operand']
  %s0 = inlined_call_operand.vmem [shape: bf16[8,105], index: 0, kind: input, shape index: {}]
  %s1 = inlined_call_operand.vmem [shape: bf16[105,128], index: 1, kind: input, shape index: {}]
  %s2 = inlined_call_operand.vmem [shape: f32[1,128], index: 2, kind: input, shape index: {}]
  %s3 = inlined_call_operand.vmem [shape: bf16[8,128], index: 3, kind: output, shape index: {}]
  %s4 = sld [smem:[#allocation0]]
  $region30: #{_lambda_.10} parent=0
    _
  %s6 = ssub.s32 1, %s4
  %s7 = scalar_select 0, %s6, %s4
  // Predicated region
  $region2: #{_lambda_.10} parent=0 // pred_check
    _
  $region3: #{_lambda_.10} parent=0 // pred_check_branch
    %9 = sbr.rel (0) target = $region5
  $region4: #{_lambda_.10} parent=0 // pred_region
    _
  $region5: #{_lambda_.10} parent=0 // pred_fallthru
    _
  // Predicated region
  $region6: #{_lambda_.10} parent=0 // pred_check
    _
  $region7: #{_lambda_.10} parent=0 // pred_check_branch
    %11 = sbr.rel (0) target = $region9
  $region8: #{_lambda_.10} parent=0 // pred_region
    _
  $region9: #{_lambda_.10} parent=0 // pred_fallthru
    _
  // Predicated region
  $region10: #{_lambda_.10} parent=0 // pred_check
    _
  $region11: #{_lambda_.10} parent=0 // pred_check_branch
    %13 = sbr.rel (0) target = $region13
  $region12: #{_lambda_.10} parent=0 // pred_region
    _
  $region13: #{_lambda_.10} parent=0 // pred_fallthru
    _
  %p15 = scmp.eq.s32.totalorder 0, 0
  // Predicated region
  $region14: #{_lambda_.10} parent=0 // pred_check
    %p16 = pneg %p15
  $region15: #{_lambda_.10} parent=0 // pred_check_branch
    %18 = sbr.rel (%p16) target = $region17
  $region16: #{_lambda_.10} parent=0 // pred_region
    %19 = vst [vmem:[#allocation2] sm:$0xff] 0.0
  $region17: #{_lambda_.10} parent=0 // pred_fallthru
    _
  %v20 = vld [vmem:[#allocation2] sm:$0xff]
  %v21 = vld [vmem:[%s0] sm:$0xf]
  %v22 = vld [vmem:[%s1] sm:$0xf]
  %v23 = vld [vmem:[%s1 + $0x4] sm:$0xf]
  %v24 = vld [vmem:[%s1 + $0x8] sm:$0xf]
  %v25 = vld [vmem:[%s1 + $0xc] sm:$0xf]
  %v26 = vld [vmem:[%s1 + $0x10] sm:$0xf]
  %v27 = vld [vmem:[%s1 + $0x14] sm:$0xf]
  %v28 = vld [vmem:[%s1 + $0x18] sm:$0xf]
  %v29 = vld [vmem:[%s1 + $0x1c] sm:$0xf]
  %v30 = vld [vmem:[%s1 + $0x20] sm:$0xf]
  %v31 = vld [vmem:[%s1 + $0x24] sm:$0xf]
  %v32 = vld [vmem:[%s1 + $0x28] sm:$0xf]
  %v33 = vld [vmem:[%s1 + $0x2c] sm:$0xf]
  %v34 = vld [vmem:[%s1 + $0x30] sm:$0xf]
  %v35 = vld [vmem:[%s1 + $0x34] sm:$0x1]
  %v50 = vunpack.c.l.b16 %v22
  %v51 = vunpack.c.l.b16 %v23
  %v52 = vunpack.c.l.b16 %v24
  %v53 = vunpack.c.l.b16 %v25
  %v54 = vunpack.c.l.b16 %v26
  %v55 = vunpack.c.l.b16 %v27
  %v56 = vunpack.c.l.b16 %v28
  %v57 = vunpack.c.l.b16 %v29
  %v58 = vunpack.c.l.b16 %v30
  %v59 = vunpack.c.l.b16 %v31
  %v60 = vunpack.c.l.b16 %v32
  %v61 = vunpack.c.l.b16 %v33
  %v62 = vunpack.c.l.b16 %v34
  %v63 = vunpack.c.l.b16 %v35
  %v64 = vpack.c.b16 %v51, %v50
  %v65 = vpack.c.b16 %v53, %v52
  %v66 = vpack.c.b16 %v55, %v54
  %v67 = vpack.c.b16 %v57, %v56
  %v68 = vpack.c.b16 %v59, %v58
  %v69 = vpack.c.b16 %v61, %v60
  %v70 = vpack.c.b16 %v63, %v62
  %vm77 = vcmask 859136
  %v79 = vsel %vm77, %v21, 0
  %vm81 = vcmask 1043456
  %vm82 = vcmask 1044480
  %v83 = vsel %vm81, 4294967295, 65535
  %v84 = vsel %vm82, %v83, 0
  %v86 = vand.u32 %v70, %v84
  %88 = vmatprep.subr.bf16.mxu0 0
  %89 = vmatpush1.bf16.msra.mxu0 %v64
  %90 = vmatprep.subr.bf16.mxu0 0
  %91 = vmatpush1.bf16.msra.mxu0 %v65
  %92 = vmatprep.subr.bf16.mxu0 0
  %93 = vmatpush1.bf16.msra.mxu0 %v66
  %94 = vmatprep.subr.bf16.mxu0 0
  %95 = vmatpush1.bf16.msra.mxu0 %v67
  %96 = vmatprep.subr.bf16.mxu0 0
  %97 = vmatpush1.bf16.msra.mxu0 %v68
  %98 = vmatprep.subr.bf16.mxu0 0
  %99 = vmatpush1.bf16.msra.mxu0 %v69
  %100 = vmatprep.subr.bf16.mxu0 0
  %101 = vmatpush1.bf16.msra.mxu0 %v86
  %102 = vmatprep.subr.bf16.mxu0 0
  %103 = vmatpush1.bf16.msra.mxu0 0
  %104 = vmatprep.subr.bf16.mxu0 0
  %105 = vmatpush1.bf16.msra.mxu0 0
  %106 = vmatprep.subr.bf16.mxu0 0
  %107 = vmatpush1.bf16.msra.mxu0 0
  %108 = vmatprep.subr.bf16.mxu0 0
  %109 = vmatpush1.bf16.msra.mxu0 0
  %110 = vmatprep.subr.bf16.mxu0 0
  %111 = vmatpush1.bf16.msra.mxu0 0
  %112 = vmatprep.subr.bf16.mxu0 0
  %113 = vmatpush1.bf16.msra.mxu0 0
  %114 = vmatprep.subr.bf16.mxu0 0
  %115 = vmatpush1.bf16.msra.mxu0 0
  %116 = vmatprep.subr.bf16.mxu0 0
  %117 = vmatpush1.bf16.msra.mxu0 0
  %118 = vmatprep.subr.bf16.mxu0 0
  %119 = vmatpush1.bf16.msra.mxu0 0
  %120 = vmatprep.mubr.bf16.mxu0 0
  %121 = vmatmul.mubr.bf16.gmra.mrb[0].mxu0 %v79
  %v122 = vpop.f32.mrb[0].mxu0
  %v123 = vadd.f32 0.0, %v122
  %v124 = vpop.f32.mrb[0].mxu0
  %v125 = vpop.f32.mrb[0].mxu0
  %v126 = vpop.f32.mrb[0].mxu0
  %127 = vdwg.mxu0
  %v128 = vadd.f32 %v20, %v123
  %129 = vst [vmem:[#allocation2] sm:$0xff] %v128
  // Predicated region
  $region18: #{_lambda_.10} parent=0 // pred_check
    %p130 = pneg %p15
  $region19: #{_lambda_.10} parent=0 // pred_check_branch
    %132 = sbr.rel (%p130) target = $region21
  $region20: #{_lambda_.10} parent=0 // pred_region
    %v133 = vld [vmem:[#allocation2] sm:$0xff]
    %v134 = vld [vmem:[%s2] sm:$0x1]
    %v136 = vlaneseq
    %v137 = vshrl.u32 %v136, 7
    %v138 = vsub.s32 0, %v137
    %v139 = vrot.slane %v134, %v138
    %v141 = vadd.f32 %v133, %v139
    %v142 = vpack.c.bf16 %v141, %v141
    %143 = vst [vmem:[%s3] sm:$0xf] %v142
  $region21: #{_lambda_.10} parent=0 // pred_fallthru
    _
  // Predicated region
  $region22: #{_lambda_.10} parent=0 // pred_check
    _
  $region23: #{_lambda_.10} parent=0 // pred_check_branch
    %145 = sbr.rel (0) target = $region25
  $region24: #{_lambda_.10} parent=0 // pred_region
    _
  $region25: #{_lambda_.10} parent=0 // pred_fallthru
    _
  // Predicated region
  $region26: #{_lambda_.10} parent=0 // pred_check
    _
  $region27: #{_lambda_.10} parent=0 // pred_check_branch
    %147 = sbr.rel (0) target = $region29
  $region28: #{_lambda_.10} parent=0 // pred_region
    _
  $region29: #{_lambda_.10} parent=0 // pred_fallthru
    _

// kernel: _lambda_.13
$region0: #{_lambda_.13}
  #allocation0 [shape = 'u32[]', space=smem, size = 0x4, offset = 0x4, fixed_abs, tag = 'smem constant byte address 0x4 - core index']
  #allocation1 [shape = 'u32[144,128]{1,0:T(1,128)}', space=vmem, size = 0x12000, scoped, tag = 'internal scratch']
  #allocation2 [shape = 'f32[2,128]{1,0:T(2,128)}', space=vmem, size = 0x400, scoped, tag = 'scratch operand']
  %s0 = inlined_call_operand.vmem [shape: bf16[2,105], index: 0, kind: input, shape index: {}]
  %s1 = inlined_call_operand.vmem [shape: bf16[105,128], index: 1, kind: input, shape index: {}]
  %s2 = inlined_call_operand.vmem [shape: f32[1,128], index: 2, kind: input, shape index: {}]
  %s3 = inlined_call_operand.hbm [shape: f32[2,128], index: 3, kind: output, shape index: {}]
  %s4 = sld [smem:[#allocation0]]
  $region30: #{_lambda_.13} parent=0
    _
  %s6 = ssub.s32 1, %s4
  %s7 = scalar_select 0, %s6, %s4
  $region1: #{_lambda_.13} parent=0
    #allocation3 [shape = 'u8[1024]{0}', space=vmem, size = 0x400, scoped, tag = 'output window, operand 0, single buffered']
    #allocation4 [shape = 's32[1]{0}', space=sflag, size = 0x4, scoped, tag = 'scoped memory for _lambda_.13']
    %8 = vsyncpa [#allocation4], 0
    // Predicated region
    $region2: #{_lambda_.13} parent=1 // pred_check
      _
    $region3: #{_lambda_.13} parent=1 // pred_check_branch
      %10 = sbr.rel (0) target = $region5
    $region4: #{_lambda_.13} parent=1 // pred_region
      _
    $region5: #{_lambda_.13} parent=1 // pred_fallthru
      _
    // Predicated region
    $region6: #{_lambda_.13} parent=1 // pred_check
      _
    $region7: #{_lambda_.13} parent=1 // pred_check_branch
      %12 = sbr.rel (0) target = $region9
    $region8: #{_lambda_.13} parent=1 // pred_region
      _
    $region9: #{_lambda_.13} parent=1 // pred_fallthru
      _
    // Predicated region
    $region10: #{_lambda_.13} parent=1 // pred_check
      _
    $region11: #{_lambda_.13} parent=1 // pred_check_branch
      %14 = sbr.rel (0) target = $region13
    $region12: #{_lambda_.13} parent=1 // pred_region
      _
    $region13: #{_lambda_.13} parent=1 // pred_fallthru
      _
    %p16 = scmp.eq.s32.totalorder 0, 0
    // Predicated region
    $region14: #{_lambda_.13} parent=1 // pred_check
      %p17 = pneg %p16
    $region15: #{_lambda_.13} parent=1 // pred_check_branch
      %19 = sbr.rel (%p17) target = $region17
    $region16: #{_lambda_.13} parent=1 // pred_region
      %20 = vst [vmem:[#allocation2] sm:$0x3] 0.0
    $region17: #{_lambda_.13} parent=1 // pred_fallthru
      _
    %v21 = vld [vmem:[#allocation2] sm:$0x3]
    %v22 = vld [vmem:[%s0] sm:$0x1]
    %v23 = vld [vmem:[%s1] sm:$0xf]
    %v24 = vld [vmem:[%s1 + $0x4] sm:$0xf]
    %v25 = vld [vmem:[%s1 + $0x8] sm:$0xf]
    %v26 = vld [vmem:[%s1 + $0xc] sm:$0xf]
    %v27 = vld [vmem:[%s1 + $0x10] sm:$0xf]
    %v28 = vld [vmem:[%s1 + $0x14] sm:$0xf]
    %v29 = vld [vmem:[%s1 + $0x18] sm:$0xf]
    %v30 = vld [vmem:[%s1 + $0x1c] sm:$0xf]
    %v31 = vld [vmem:[%s1 + $0x20] sm:$0xf]
    %v32 = vld [vmem:[%s1 + $0x24] sm:$0xf]
    %v33 = vld [vmem:[%s1 + $0x28] sm:$0xf]
    %v34 = vld [vmem:[%s1 + $0x2c] sm:$0xf]
    %v35 = vld [vmem:[%s1 + $0x30] sm:$0xf]
    %v36 = vld [vmem:[%s1 + $0x34] sm:$0x1]
    %v51 = vunpack.c.l.b16 %v23
    %v52 = vunpack.c.l.b16 %v24
    %v53 = vunpack.c.l.b16 %v25
    %v54 = vunpack.c.l.b16 %v26
    %v55 = vunpack.c.l.b16 %v27
    %v56 = vunpack.c.l.b16 %v28
    %v57 = vunpack.c.l.b16 %v29
    %v58 = vunpack.c.l.b16 %v30
    %v59 = vunpack.c.l.b16 %v31
    %v60 = vunpack.c.l.b16 %v32
    %v61 = vunpack.c.l.b16 %v33
    %v62 = vunpack.c.l.b16 %v34
    %v63 = vunpack.c.l.b16 %v35
    %v64 = vunpack.c.l.b16 %v36
    %v65 = vpack.c.b16 %v52, %v51
    %v66 = vpack.c.b16 %v54, %v53
    %v67 = vpack.c.b16 %v56, %v55
    %v68 = vpack.c.b16 %v58, %v57
    %v69 = vpack.c.b16 %v60, %v59
    %v70 = vpack.c.b16 %v62, %v61
    %v71 = vpack.c.b16 %v64, %v63
    %vm78 = vcmask 859136
    %v80 = vsel %vm78, %v22, 0
    %vm82 = vcmask 1043456
    %vm83 = vcmask 1044480
    %v84 = vsel %vm82, 4294967295, 65535
    %v85 = vsel %vm83, %v84, 0
    %v87 = vand.u32 %v71, %v85
    %89 = vmatprep.subr.bf16.mxu0 0
    %90 = vmatpush1.bf16.msra.mxu0 %v65
    %91 = vmatprep.subr.bf16.mxu0 0
    %92 = vmatpush1.bf16.msra.mxu0 %v66
    %93 = vmatprep.subr.bf16.mxu0 0
    %94 = vmatpush1.bf16.msra.mxu0 %v67
    %95 = vmatprep.subr.bf16.mxu0 0
    %96 = vmatpush1.bf16.msra.mxu0 %v68
    %97 = vmatprep.subr.bf16.mxu0 0
    %98 = vmatpush1.bf16.msra.mxu0 %v69
    %99 = vmatprep.subr.bf16.mxu0 0
    %100 = vmatpush1.bf16.msra.mxu0 %v70
    %101 = vmatprep.subr.bf16.mxu0 0
    %102 = vmatpush1.bf16.msra.mxu0 %v87
    %103 = vmatprep.subr.bf16.mxu0 0
    %104 = vmatpush1.bf16.msra.mxu0 0
    %105 = vmatprep.subr.bf16.mxu0 0
    %106 = vmatpush1.bf16.msra.mxu0 0
    %107 = vmatprep.subr.bf16.mxu0 0
    %108 = vmatpush1.bf16.msra.mxu0 0
    %109 = vmatprep.subr.bf16.mxu0 0
    %110 = vmatpush1.bf16.msra.mxu0 0
    %111 = vmatprep.subr.bf16.mxu0 0
    %112 = vmatpush1.bf16.msra.mxu0 0
    %113 = vmatprep.subr.bf16.mxu0 0
    %114 = vmatpush1.bf16.msra.mxu0 0
    %115 = vmatprep.subr.bf16.mxu0 0
    %116 = vmatpush1.bf16.msra.mxu0 0
    %117 = vmatprep.subr.bf16.mxu0 0
    %118 = vmatpush1.bf16.msra.mxu0 0
    %119 = vmatprep.subr.bf16.mxu0 0
    %120 = vmatpush1.bf16.msra.mxu0 0
    %121 = vmatprep.mubr.bf16.mxu0 0
    %122 = vmatmul.mubr.bf16.gmra.mrb[0].mxu0 %v80
    %v123 = vpop.f32.mrb[0].mxu0
    %v124 = vadd.f32 0.0, %v123
    %v125 = vpop.f32.mrb[0].mxu0
    %v126 = vpop.f32.mrb[0].mxu0
    %v127 = vpop.f32.mrb[0].mxu0
    %128 = vdwg.mxu0
    %v129 = vadd.f32 %v21, %v124
    %130 = vst [vmem:[#allocation2] sm:$0x3] %v129
    // Predicated region
    $region18: #{_lambda_.13} parent=1 // pred_check
      %p131 = pneg %p16
    $region19: #{_lambda_.13} parent=1 // pred_check_branch
      %133 = sbr.rel (%p131) target = $region21
    $region20: #{_lambda_.13} parent=1 // pred_region
      %v134 = vld [vmem:[#allocation2] sm:$0x3]
      %v135 = vld [vmem:[%s2] sm:$0x1]
      %v137 = vlaneseq
      %v138 = vshrl.u32 %v137, 7
      %v139 = vsub.s32 0, %v138
      %v140 = vrot.slane %v135, %v139
      %v142 = vadd.f32 %v134, %v140
      %143 = vst [vmem:[#allocation3] sm:$0x3] %v142
    $region21: #{_lambda_.13} parent=1 // pred_fallthru
      _
    // Predicated region
    $region22: #{_lambda_.13} parent=1 // pred_check
      _
    $region23: #{_lambda_.13} parent=1 // pred_check_branch
      %145 = sbr.rel (0) target = $region25
    $region24: #{_lambda_.13} parent=1 // pred_region
      %s147 = ssub.s32 32, 32
      %148 = vsyncadd [#allocation4], %s147
      %s150 = sshll.u32 [#allocation3], 4
      %s151 = int_to_ptr.vmem [resolvable:$true] %s150
      %153 = dma.vmem_to_hbm [thread:$0]  %s151, 32, %s3, [#allocation4]
    $region25: #{_lambda_.13} parent=1 // pred_fallthru
      _
    // Predicated region
    $region26: #{_lambda_.13} parent=1 // pred_check
      _
    $region27: #{_lambda_.13} parent=1 // pred_check_branch
      %155 = sbr.rel (0) target = $region29
    $region28: #{_lambda_.13} parent=1 // pred_region
      %156 = dma.done [#allocation4], 32
    $region29: #{_lambda_.13} parent=1 // pred_fallthru
      _
    %157 = vsyncpa [#allocation4], 1

// kernel: _lambda_.12
$region0: #{_lambda_.12}
  #allocation0 [shape = 'u32[]', space=smem, size = 0x4, offset = 0x4, fixed_abs, tag = 'smem constant byte address 0x4 - core index']
  #allocation1 [shape = 'u32[144,128]{1,0:T(1,128)}', space=vmem, size = 0x12000, scoped, tag = 'internal scratch']
  #allocation2 [shape = 'f32[6,128]{1,0:T(8,128)}', space=vmem, size = 0x1000, scoped, tag = 'scratch operand']
  %s0 = inlined_call_operand.vmem [shape: bf16[6,70], index: 0, kind: input, shape index: {}]
  %s1 = inlined_call_operand.vmem [shape: bf16[70,128], index: 1, kind: input, shape index: {}]
  %s2 = inlined_call_operand.vmem [shape: f32[1,128], index: 2, kind: input, shape index: {}]
  %s3 = inlined_call_operand.vmem [shape: bf16[6,128], index: 3, kind: output, shape index: {}]
  %s4 = sld [smem:[#allocation0]]
  $region30: #{_lambda_.12} parent=0
    _
  %s6 = ssub.s32 1, %s4
  %s7 = scalar_select 0, %s6, %s4
  // Predicated region
  $region2: #{_lambda_.12} parent=0 // pred_check
    _
  $region3: #{_lambda_.12} parent=0 // pred_check_branch
    %9 = sbr.rel (0) target = $region5
  $region4: #{_lambda_.12} parent=0 // pred_region
    _
  $region5: #{_lambda_.12} parent=0 // pred_fallthru
    _
  // Predicated region
  $region6: #{_lambda_.12} parent=0 // pred_check
    _
  $region7: #{_lambda_.12} parent=0 // pred_check_branch
    %11 = sbr.rel (0) target = $region9
  $region8: #{_lambda_.12} parent=0 // pred_region
    _
  $region9: #{_lambda_.12} parent=0 // pred_fallthru
    _
  // Predicated region
  $region10: #{_lambda_.12} parent=0 // pred_check
    _
  $region11: #{_lambda_.12} parent=0 // pred_check_branch
    %13 = sbr.rel (0) target = $region13
  $region12: #{_lambda_.12} parent=0 // pred_region
    _
  $region13: #{_lambda_.12} parent=0 // pred_fallthru
    _
  %p15 = scmp.eq.s32.totalorder 0, 0
  // Predicated region
  $region14: #{_lambda_.12} parent=0 // pred_check
    %p16 = pneg %p15
  $region15: #{_lambda_.12} parent=0 // pred_check_branch
    %18 = sbr.rel (%p16) target = $region17
  $region16: #{_lambda_.12} parent=0 // pred_region
    %19 = vst [vmem:[#allocation2] sm:$0x3f] 0.0
  $region17: #{_lambda_.12} parent=0 // pred_fallthru
    _
  %v20 = vld [vmem:[#allocation2] sm:$0x3f]
  %v21 = vld [vmem:[%s0] sm:$0x7]
  %v22 = vld [vmem:[%s1] sm:$0xf]
  %v23 = vld [vmem:[%s1 + $0x4] sm:$0xf]
  %v24 = vld [vmem:[%s1 + $0x8] sm:$0xf]
  %v25 = vld [vmem:[%s1 + $0xc] sm:$0xf]
  %v26 = vld [vmem:[%s1 + $0x10] sm:$0xf]
  %v27 = vld [vmem:[%s1 + $0x14] sm:$0xf]
  %v28 = vld [vmem:[%s1 + $0x18] sm:$0xf]
  %v29 = vld [vmem:[%s1 + $0x1c] sm:$0xf]
  %v30 = vld [vmem:[%s1 + $0x20] sm:$0x7]
  %v40 = vunpack.c.l.b16 %v22
  %v41 = vunpack.c.l.b16 %v23
  %v42 = vunpack.c.l.b16 %v24
  %v43 = vunpack.c.l.b16 %v25
  %v44 = vunpack.c.l.b16 %v26
  %v45 = vunpack.c.l.b16 %v27
  %v46 = vunpack.c.l.b16 %v28
  %v47 = vunpack.c.l.b16 %v29
  %v48 = vunpack.c.l.b16 %v30
  %v49 = vpack.c.b16 %v41, %v40
  %v50 = vpack.c.b16 %v43, %v42
  %v51 = vpack.c.b16 %v45, %v44
  %v52 = vpack.c.b16 %v47, %v46
  %v53 = vpack.c.b16 %v48, %v48
  %vm58 = vcmask 572416
  %v60 = vsel %vm58, %v21, 0
  %vm62 = vcmask 1042432
  %v64 = vsel %vm62, %v53, 0
  %66 = vmatprep.subr.bf16.mxu0 0
  %67 = vmatpush1.bf16.msra.mxu0 %v49
  %68 = vmatprep.subr.bf16.mxu0 0
  %69 = vmatpush1.bf16.msra.mxu0 %v50
  %70 = vmatprep.subr.bf16.mxu0 0
  %71 = vmatpush1.bf16.msra.mxu0 %v51
  %72 = vmatprep.subr.bf16.mxu0 0
  %73 = vmatpush1.bf16.msra.mxu0 %v52
  %74 = vmatprep.subr.bf16.mxu0 0
  %75 = vmatpush1.bf16.msra.mxu0 %v64
  %76 = vmatprep.subr.bf16.mxu0 0
  %77 = vmatpush1.bf16.msra.mxu0 0
  %78 = vmatprep.subr.bf16.mxu0 0
  %79 = vmatpush1.bf16.msra.mxu0 0
  %80 = vmatprep.subr.bf16.mxu0 0
  %81 = vmatpush1.bf16.msra.mxu0 0
  %82 = vmatprep.subr.bf16.mxu0 0
  %83 = vmatpush1.bf16.msra.mxu0 0
  %84 = vmatprep.subr.bf16.mxu0 0
  %85 = vmatpush1.bf16.msra.mxu0 0
  %86 = vmatprep.subr.bf16.mxu0 0
  %87 = vmatpush1.bf16.msra.mxu0 0
  %88 = vmatprep.subr.bf16.mxu0 0
  %89 = vmatpush1.bf16.msra.mxu0 0
  %90 = vmatprep.subr.bf16.mxu0 0
  %91 = vmatpush1.bf16.msra.mxu0 0
  %92 = vmatprep.subr.bf16.mxu0 0
  %93 = vmatpush1.bf16.msra.mxu0 0
  %94 = vmatprep.subr.bf16.mxu0 0
  %95 = vmatpush1.bf16.msra.mxu0 0
  %96 = vmatprep.subr.bf16.mxu0 0
  %97 = vmatpush1.bf16.msra.mxu0 0
  %98 = vmatprep.mubr.bf16.mxu0 0
  %99 = vmatmul.mubr.bf16.gmra.mrb[0].mxu0 %v60
  %v100 = vpop.f32.mrb[0].mxu0
  %v101 = vadd.f32 0.0, %v100
  %v102 = vpop.f32.mrb[0].mxu0
  %v103 = vpop.f32.mrb[0].mxu0
  %v104 = vpop.f32.mrb[0].mxu0
  %105 = vdwg.mxu0
  %v106 = vadd.f32 %v20, %v101
  %107 = vst [vmem:[#allocation2] sm:$0x3f] %v106
  // Predicated region
  $region18: #{_lambda_.12} parent=0 // pred_check
    %p108 = pneg %p15
  $region19: #{_lambda_.12} parent=0 // pred_check_branch
    %110 = sbr.rel (%p108) target = $region21
  $region20: #{_lambda_.12} parent=0 // pred_region
    %v111 = vld [vmem:[#allocation2] sm:$0x3f]
    %v112 = vld [vmem:[%s2] sm:$0x1]
    %v114 = vlaneseq
    %v115 = vshrl.u32 %v114, 7
    %v116 = vsub.s32 0, %v115
    %v117 = vrot.slane %v112, %v116
    %v119 = vadd.f32 %v111, %v117
    %v120 = vmax.f32 %v119, 0.0
    %v121 = vpack.c.bf16 %v120, %v120
    %122 = vst [vmem:[%s3] sm:$0x7] %v121
  $region21: #{_lambda_.12} parent=0 // pred_fallthru
    _
  // Predicated region
  $region22: #{_lambda_.12} parent=0 // pred_check
    _
  $region23: #{_lambda_.12} parent=0 // pred_check_branch
    %124 = sbr.rel (0) target = $region25
  $region24: #{_lambda_.12} parent=0 // pred_region
    _
  $region25: #{_lambda_.12} parent=0 // pred_fallthru
    _
  // Predicated region
  $region26: #{_lambda_.12} parent=0 // pred_check
    _
  $region27: #{_lambda_.12} parent=0 // pred_check_branch
    %126 = sbr.rel (0) target = $region29
  $region28: #{_lambda_.12} parent=0 // pred_region
    _
  $region29: #{_lambda_.12} parent=0 // pred_fallthru
    _

</llo_original>
